<compile_context>
chip_gen: v6e
topology: v6e:2x2x1
jax: 0.10.0
libtpu: 0.0.40
codegen_flags: <defaults>
</compile_context>

<pallas_src>
import jax
import jax.numpy as jnp
from jax import lax
from jax.experimental import pallas as pl
from jax.experimental.pallas import tpu as pltpu

H1, H2 = 512, 256  # hidden widths of the Discriminator MLP


def _leaky_relu(x, slope=0.2):
    return jnp.where(x > 0, x, slope * x)


def discriminator_kernel(x_ref, w1_ref, b1_ref, w2_ref, b2_ref, w3_ref, b3_ref,
                         o_ref, acc_ref):
    k = pl.program_id(1)

    @pl.when(k == 0)
    def _():
        acc_ref[...] = jnp.zeros_like(acc_ref)

    # Layer 1 partial product on the MXU: bf16 inputs, f32 accumulation.
    acc_ref[...] += jnp.dot(x_ref[...], w1_ref[...],
                            preferred_element_type=jnp.float32)

    @pl.when(k == pl.num_programs(1) - 1)
    def _():
        # Finish layer 1 in f32.
        h1 = _leaky_relu(acc_ref[...] + b1_ref[...])
        # Layer 2: bf16 MXU matmul, f32 epilogue.
        h2 = jnp.dot(h1.astype(jnp.bfloat16), w2_ref[...],
                     preferred_element_type=jnp.float32) + b2_ref[...]
        h2 = _leaky_relu(h2)
        # Layer 3 (output width 1): contract the 256 features of both operands
        # so the result lands batch-on-lanes as a (1, TM) row -> lane-dense
        # store instead of a width-1 masked column store.
        h3 = lax.dot_general(
            w3_ref[...].astype(jnp.bfloat16), h2.astype(jnp.bfloat16),
            dimension_numbers=(((1,), (1,)), ((), ())),
            preferred_element_type=jnp.float32) + b3_ref[0, 0]
        # Sigmoid: EUP exp + approximate reciprocal (separate EUP slot).
        o_ref[...] = pl.reciprocal(1.0 + jnp.exp(-h3), approx=True)


def _round_up(a, b):
    return (a + b - 1) // b * b


def _multi_tile_tm():
    # Batch tile when B is too large for a single m tile:
    # 256 matches the 2x256 MXU on v6e/v7x; 128 on v5e.
    try:
        kind = jax.devices()[0].device_kind.lower()
        if "v5 lite" in kind or "v5e" in kind or "v5litepod" in kind:
            return 128
    except Exception:
        pass
    return 256


def discriminator_forward(img, params):
    """img: [B, C, H, W] float32.  Returns validity [B, 1] float32."""
    w1, b1, w2, b2, w3, b3 = params
    B = img.shape[0]
    x = img.reshape(B, -1)          # NCHW flatten, same order as torch .view(B, -1)
    D = x.shape[1]

    # ---- batch (M) tiling ----------------------------------------------------
    # Multiple of 16 (bf16 sublane packing); 128-aligned once B is large.
    B_pad = _round_up(B, 16) if B <= 128 else _round_up(B, 128)
    if B_pad <= 1024:
        TM = B_pad                   # single m tile -> w1 streamed exactly once
    else:
        TM = _multi_tile_tm()
        B_pad = _round_up(B_pad, TM)

    # ---- flattened-image (K) tiling -------------------------------------------
    # 256-aligned tiles, >=2 K steps whenever D > 256 (DMA/compute overlap),
    # capped at 2048 so the double-buffered working set stays well inside VMEM.
    D_256 = _round_up(D, 256)
    if D_256 <= 256:
        TK = D_256
    else:
        nk = max(2, -(-D_256 // 2048))
        TK = _round_up(-(-D_256 // nk), 256)
    D_pad = _round_up(D, TK)

    if B_pad != B or D_pad != D:
        x = jnp.pad(x, ((0, B_pad - B), (0, D_pad - D)))
    w1_p = w1 if D_pad == D else jnp.pad(w1, ((0, D_pad - D), (0, 0)))

    # bf16 for the streamed MXU operands; biases / final weight stay f32.
    x_bf = x.astype(jnp.bfloat16)
    w1_bf = w1_p.astype(jnp.bfloat16)
    w2_bf = w2.astype(jnp.bfloat16)
    b1_r = b1.reshape(1, H1).astype(jnp.float32)
    b2_r = b2.reshape(1, H2).astype(jnp.float32)
    w3_row = w3.reshape(1, H2).astype(jnp.float32)
    b3_s = b3.reshape(1, 1).astype(jnp.float32)

    grid = (B_pad // TM, D_pad // TK)

    out = pl.pallas_call(
        discriminator_kernel,
        out_shape=jax.ShapeDtypeStruct((1, B_pad), jnp.float32),
        grid_spec=pltpu.PrefetchScalarGridSpec(
            num_scalar_prefetch=0,
            grid=grid,
            in_specs=[
                pl.BlockSpec((TM, TK), lambda m, k: (m, k)),    # x tile
                pl.BlockSpec((TK, H1), lambda m, k: (k, 0)),    # w1 tile (streamed)
                pl.BlockSpec((1, H1), lambda m, k: (0, 0)),     # b1 (resident)
                pl.BlockSpec((H1, H2), lambda m, k: (0, 0)),    # w2 (resident)
                pl.BlockSpec((1, H2), lambda m, k: (0, 0)),     # b2 (resident)
                pl.BlockSpec((1, H2), lambda m, k: (0, 0)),     # w3 row (resident)
                pl.BlockSpec(memory_space=pltpu.MemorySpace.SMEM),  # b3 scalar
            ],
            out_specs=pl.BlockSpec((1, TM), lambda m, k: (0, m)),  # lane-dense row
            scratch_shapes=[pltpu.VMEM((TM, H1), jnp.float32)],    # layer-1 acc
        ),
        compiler_params=pltpu.CompilerParams(
            dimension_semantics=("parallel", "arbitrary"),
            vmem_limit_bytes=48 * 1024 * 1024),
    )(x_bf, w1_bf, b1_r, w2_bf, b2_r, w3_row, b3_s)

    return out[0, :B].reshape(B, 1)


def init_params(key, in_dim):
    """Deterministic init matching torch.nn.Linear default (uniform +/- 1/sqrt(fan_in))."""
    dims = [(in_dim, H1), (H1, H2), (H2, 1)]
    params = []
    for i, (fan_in, fan_out) in enumerate(dims):
        kw, kb = jax.random.split(jax.random.fold_in(key, i))
        bound = 1.0 / (fan_in ** 0.5)
        w = jax.random.uniform(kw, (fan_in, fan_out), jnp.float32, -bound, bound)
        b = jax.random.uniform(kb, (1, fan_out), jnp.float32, -bound, bound)
        params += [w, b]
    return tuple(params)


if __name__ == "__main__":
    # Small, module-consistent shapes (MNIST-like GAN): batch=8, channels=1, img=28.
    # D=784 exercises the padded, 2-K-step pipelined path.
    B, C, H, W = 8, 1, 28, 28
    key = jax.random.PRNGKey(0)
    k_img, k_par = jax.random.split(key)

    img = jax.random.normal(k_img, (B, C, H, W), jnp.float32)
    params = init_params(k_par, C * H * W)

    validity = jax.block_until_ready(discriminator_forward(img, params))

    # Pure-f32 JAX reference of the same math (kernel uses bf16 MXU inputs,
    # so tolerance is loosened accordingly).
    x = img.reshape(B, -1)
    w1, b1, w2, b2, w3, b3 = params
    h = x @ w1 + b1
    h = jnp.where(h > 0, h, 0.2 * h)
    h = h @ w2 + b2
    h = jnp.where(h > 0, h, 0.2 * h)
    ref = jax.nn.sigmoid(h @ w3 + b3)

    assert validity.shape == (B, 1)
    err = float(jnp.max(jnp.abs(validity - ref)))
    assert jnp.allclose(validity, ref, atol=2e-2, rtol=2e-2), err

    print("KERNEL_OK")
</pallas_src>

<mosaic_0001>
module attributes {stable_mosaic.version = 11 : i64} {
  func.func @discriminator_kernel(%arg0: i32, %arg1: i32, %arg2: memref<16x512xbf16, #tpu.memory_space<vmem>>, %arg3: memref<512x512xbf16, #tpu.memory_space<vmem>>, %arg4: memref<1x512xf32, #tpu.memory_space<vmem>>, %arg5: memref<512x256xbf16, #tpu.memory_space<vmem>>, %arg6: memref<1x256xf32, #tpu.memory_space<vmem>>, %arg7: memref<1x256xf32, #tpu.memory_space<vmem>>, %arg8: memref<1x1xf32, #tpu.memory_space<smem>>, %arg9: memref<1x16xf32, #tpu.memory_space<vmem>>, %arg10: memref<16x512xf32, #tpu.memory_space<vmem>>) attributes {dimension_semantics = [#tpu.dimension_semantics<parallel>, #tpu.dimension_semantics<arbitrary>], iteration_bounds = array<i64: 1, 2>, scalar_prefetch = 0 : i64, scratch_operands = 1 : i64, tpu.core_type = #tpu.core_type<tc>, window_params = [{transform_indices = @transform_0, window_bounds = array<i64: 16, 512>}, {transform_indices = @transform_1, window_bounds = array<i64: 512, 512>}, {pipeline_mode = #tpu.pipeline_mode<synchronous>, transform_indices = @transform_2, window_bounds = array<i64: 1, 512>}, {pipeline_mode = #tpu.pipeline_mode<synchronous>, transform_indices = @transform_3, window_bounds = array<i64: 512, 256>}, {pipeline_mode = #tpu.pipeline_mode<synchronous>, transform_indices = @transform_4, window_bounds = array<i64: 1, 256>}, {pipeline_mode = #tpu.pipeline_mode<synchronous>, transform_indices = @transform_5, window_bounds = array<i64: 1, 256>}, {transform_indices = @transform_6, window_bounds = array<i64: 1, 1>}, {transform_indices = @transform_7, window_bounds = array<i64: 1, 16>}]} {
    %c0_i32 = arith.constant 0 : i32
    %0 = arith.cmpi eq, %arg1, %c0_i32 : i32
    %1 = arith.extui %0 : i1 to i32
    %c0_i32_0 = arith.constant 0 : i32
    %2 = arith.cmpi ne, %1, %c0_i32_0 : i32
    scf.if %2 {
      %cst_9 = arith.constant 0.000000e+00 : f32
      %12 = vector.broadcast %cst_9 : f32 to vector<16x512xf32>
      %c0_10 = arith.constant 0 : index
      %c0_11 = arith.constant 0 : index
      %13 = vector.load %arg10[%c0_10, %c0_11] : memref<16x512xf32, #tpu.memory_space<vmem>>, vector<16x512xf32>
      tpu.vector_store %arg10[%c0_10, %c0_11], %12 {strides = array<i32>} : memref<16x512xf32, #tpu.memory_space<vmem>>, vector<16x512xf32>,
    } else {
    }
    %c0 = arith.constant 0 : index
    %c0_1 = arith.constant 0 : index
    %3 = vector.load %arg10[%c0, %c0_1] : memref<16x512xf32, #tpu.memory_space<vmem>>, vector<16x512xf32>
    %c0_2 = arith.constant 0 : index
    %c0_3 = arith.constant 0 : index
    %4 = vector.load %arg2[%c0_2, %c0_3] : memref<16x512xbf16, #tpu.memory_space<vmem>>, vector<16x512xbf16>
    %c0_4 = arith.constant 0 : index
    %c0_5 = arith.constant 0 : index
    %5 = vector.load %arg3[%c0_4, %c0_5] : memref<512x512xbf16, #tpu.memory_space<vmem>>, vector<512x512xbf16>
    %cst = arith.constant dense<0.000000e+00> : vector<16x512xf32>
    %6 = tpu.matmul %4, %5, %cst {dimension_numbers = #tpu.dot_dimension_numbers<[1], [0], [0], [1], [0, 0, 1, 1], [], []>} : vector<16x512xbf16>, vector<512x512xbf16>, vector<16x512xf32> -> vector<16x512xf32>
    %7 = arith.addf %3, %6 : vector<16x512xf32>
    %c0_6 = arith.constant 0 : index
    %c0_7 = arith.constant 0 : index
    %8 = vector.load %arg10[%c0_6, %c0_7] : memref<16x512xf32, #tpu.memory_space<vmem>>, vector<16x512xf32>
    tpu.vector_store %arg10[%c0_6, %c0_7], %7 {strides = array<i32>} : memref<16x512xf32, #tpu.memory_space<vmem>>, vector<16x512xf32>,
    %c1_i32 = arith.constant 1 : i32
    %9 = arith.cmpi eq, %arg1, %c1_i32 : i32
    %10 = arith.extui %9 : i1 to i32
    %c0_i32_8 = arith.constant 0 : i32
    %11 = arith.cmpi ne, %10, %c0_i32_8 : i32
    scf.if %11 {
      %c0_9 = arith.constant 0 : index
      %c0_10 = arith.constant 0 : index
      %12 = vector.load %arg10[%c0_9, %c0_10] : memref<16x512xf32, #tpu.memory_space<vmem>>, vector<16x512xf32>
      %c0_11 = arith.constant 0 : index
      %c0_12 = arith.constant 0 : index
      %13 = vector.load %arg4[%c0_11, %c0_12] : memref<1x512xf32, #tpu.memory_space<vmem>>, vector<1x512xf32>
      %14 = vector.broadcast %13 : vector<1x512xf32> to vector<16x512xf32>
      %15 = arith.addf %12, %14 : vector<16x512xf32>
      %cst_13 = arith.constant 0.000000e+00 : f32
      %16 = vector.broadcast %cst_13 : f32 to vector<16x512xf32>
      %17 = arith.cmpf ogt, %15, %16 : vector<16x512xf32>
      %cst_14 = arith.constant 2.000000e-01 : f32
      %18 = vector.broadcast %cst_14 : f32 to vector<16x512xf32>
      %19 = arith.mulf %18, %15 : vector<16x512xf32>
      %20 = arith.select %17, %15, %19 : vector<16x512xi1>, vector<16x512xf32>
      %21 = arith.truncf %20 : vector<16x512xf32> to vector<16x512xbf16>
      %c0_15 = arith.constant 0 : index
      %c0_16 = arith.constant 0 : index
      %22 = vector.load %arg5[%c0_15, %c0_16] : memref<512x256xbf16, #tpu.memory_space<vmem>>, vector<512x256xbf16>
      %cst_17 = arith.constant dense<0.000000e+00> : vector<16x256xf32>
      %23 = tpu.matmul %21, %22, %cst_17 {dimension_numbers = #tpu.dot_dimension_numbers<[1], [0], [0], [1], [0, 0, 1, 1], [], []>} : vector<16x512xbf16>, vector<512x256xbf16>, vector<16x256xf32> -> vector<16x256xf32>
      %c0_18 = arith.constant 0 : index
      %c0_19 = arith.constant 0 : index
      %24 = vector.load %arg6[%c0_18, %c0_19] : memref<1x256xf32, #tpu.memory_space<vmem>>, vector<1x256xf32>
      %25 = vector.broadcast %24 : vector<1x256xf32> to vector<16x256xf32>
      %26 = arith.addf %23, %25 : vector<16x256xf32>
      %cst_20 = arith.constant 0.000000e+00 : f32
      %27 = vector.broadcast %cst_20 : f32 to vector<16x256xf32>
      %28 = arith.cmpf ogt, %26, %27 : vector<16x256xf32>
      %cst_21 = arith.constant 2.000000e-01 : f32
      %29 = vector.broadcast %cst_21 : f32 to vector<16x256xf32>
      %30 = arith.mulf %29, %26 : vector<16x256xf32>
      %31 = arith.select %28, %26, %30 : vector<16x256xi1>, vector<16x256xf32>
      %c0_22 = arith.constant 0 : index
      %c0_23 = arith.constant 0 : index
      %32 = vector.load %arg7[%c0_22, %c0_23] : memref<1x256xf32, #tpu.memory_space<vmem>>, vector<1x256xf32>
      %33 = arith.truncf %32 : vector<1x256xf32> to vector<1x256xbf16>
      %34 = arith.truncf %31 : vector<16x256xf32> to vector<16x256xbf16>
      %cst_24 = arith.constant dense<0.000000e+00> : vector<1x16xf32>
      %35 = tpu.matmul %33, %34, %cst_24 {dimension_numbers = #tpu.dot_dimension_numbers<[1], [1], [0], [0], [0, 0, 1, 0], [], []>} : vector<1x256xbf16>, vector<16x256xbf16>, vector<1x16xf32> -> vector<1x16xf32>
      %c0_25 = arith.constant 0 : index
      %c0_26 = arith.constant 0 : index
      %36 = memref.load %arg8[%c0_25, %c0_26] : memref<1x1xf32, #tpu.memory_space<smem>>
      %37 = vector.broadcast %36 : f32 to vector<1x16xf32>
      %38 = arith.addf %35, %37 : vector<1x16xf32>
      %cst_27 = arith.constant 0.000000e+00 : f32
      %39 = vector.broadcast %cst_27 : f32 to vector<1x16xf32>
      %40 = arith.subf %39, %38 : vector<1x16xf32>
      %41 = math.exp %40 : vector<1x16xf32>
      %cst_28 = arith.constant 1.000000e+00 : f32
      %42 = vector.broadcast %cst_28 : f32 to vector<1x16xf32>
      %43 = arith.addf %42, %41 : vector<1x16xf32>
      %44 = tpu.reciprocal %43 {approx = true} : vector<1x16xf32> -> vector<1x16xf32>
      %c0_29 = arith.constant 0 : index
      %c0_30 = arith.constant 0 : index
      %45 = vector.load %arg9[%c0_29, %c0_30] : memref<1x16xf32, #tpu.memory_space<vmem>>, vector<1x16xf32>
      tpu.vector_store %arg9[%c0_29, %c0_30], %44 {strides = array<i32>} : memref<1x16xf32, #tpu.memory_space<vmem>>, vector<1x16xf32>,
    } else {
    }
    return
  }
  func.func @transform_0(%arg0: i32, %arg1: i32) -> (i32, i32) {
    %c0_i32 = arith.constant 0 : i32
    return %arg0, %arg1 : i32, i32
  }
  func.func @transform_1(%arg0: i32, %arg1: i32) -> (i32, i32) {
    %c0_i32 = arith.constant 0 : i32
    %c0_i32_0 = arith.constant 0 : i32
    return %arg1, %c0_i32 : i32, i32
  }
  func.func @transform_2(%arg0: i32, %arg1: i32) -> (i32, i32) {
    %c0_i32 = arith.constant 0 : i32
    %c0_i32_0 = arith.constant 0 : i32
    %c0_i32_1 = arith.constant 0 : i32
    return %c0_i32, %c0_i32_0 : i32, i32
  }
  func.func @transform_3(%arg0: i32, %arg1: i32) -> (i32, i32) {
    %c0_i32 = arith.constant 0 : i32
    %c0_i32_0 = arith.constant 0 : i32
    %c0_i32_1 = arith.constant 0 : i32
    return %c0_i32, %c0_i32_0 : i32, i32
  }
  func.func @transform_4(%arg0: i32, %arg1: i32) -> (i32, i32) {
    %c0_i32 = arith.constant 0 : i32
    %c0_i32_0 = arith.constant 0 : i32
    %c0_i32_1 = arith.constant 0 : i32
    return %c0_i32, %c0_i32_0 : i32, i32
  }
  func.func @transform_5(%arg0: i32, %arg1: i32) -> (i32, i32) {
    %c0_i32 = arith.constant 0 : i32
    %c0_i32_0 = arith.constant 0 : i32
    %c0_i32_1 = arith.constant 0 : i32
    return %c0_i32, %c0_i32_0 : i32, i32
  }
  func.func @transform_6(%arg0: i32, %arg1: i32) -> (i32, i32) {
    %c0_i32 = arith.constant 0 : i32
    %c0_i32_0 = arith.constant 0 : i32
    %c0_i32_1 = arith.constant 0 : i32
    return %c0_i32, %c0_i32_0 : i32, i32
  }
  func.func @transform_7(%arg0: i32, %arg1: i32) -> (i32, i32) {
    %c0_i32 = arith.constant 0 : i32
    %c0_i32_0 = arith.constant 0 : i32
    return %c0_i32, %arg0 : i32, i32
  }
}

</mosaic_0001>

<llo_original>
// kernel: tpu_custom_call.1
$region0: #{tpu_custom_call.1}
  #allocation0 [shape = 'u32[]', space=smem, size = 0x4, offset = 0x4, fixed_abs, tag = 'smem constant byte address 0x4 - core index']
  #allocation1 [shape = 'u32[144,128]{1,0:T(1,128)}', space=vmem, size = 0x12000, scoped, tag = 'internal scratch']
  #allocation2 [shape = 'f32[16,512]{1,0:T(8,128)}', space=vmem, size = 0x8000, scoped, tag = 'scratch operand']
  #allocation3 [shape = 'f32[1,1]{1,0:T(1,128)S(6)}', space=smem, size = 0x200, scoped, tag = 'scoped memory for tpu_custom_call.1']
  %s0 = inlined_call_operand.hbm [shape: bf16[16,1024], index: 0, kind: input, shape index: {}]
  %s1 = inlined_call_operand.hbm [shape: bf16[1024,512], index: 1, kind: input, shape index: {}]
  %s2 = inlined_call_operand.vmem [shape: f32[1,512], index: 2, kind: input, shape index: {}]
  %s3 = inlined_call_operand.hbm [shape: bf16[512,256], index: 3, kind: input, shape index: {}]
  %s4 = inlined_call_operand.vmem [shape: f32[1,256], index: 4, kind: input, shape index: {}]
  %s5 = inlined_call_operand.vmem [shape: f32[1,256], index: 5, kind: input, shape index: {}]
  %s6 = inlined_call_operand.<no memory space> [shape: f32[1,1], index: 6, kind: input, shape index: {}]
  %s7 = inlined_call_operand.hbm [shape: f32[1,16], index: 7, kind: output, shape index: {}]
  %s8 = sld [smem:[#allocation0]]
  $region81: #{tpu_custom_call.1} parent=0
    _
  %s10 = ssub.s32 1, %s8
  %s11 = scalar_select 0, %s10, %s8
  %12 = sst [smem:[#allocation3]] %s6
  $region1: #{tpu_custom_call.1} parent=0
    #allocation4 [shape = 'u8[32768]{0}', space=vmem, size = 0x8000, scoped, tag = 'input window, operand 0']
    #allocation5 [shape = 's32[2]{0}', space=sflag, size = 0x8, scoped, tag = 'scoped memory for tpu_custom_call.1']
    #allocation6 [shape = 's32[2]{0}', space=sflag, size = 0x8, scoped, tag = 'scoped memory for tpu_custom_call.1']
    #allocation7 [shape = 'u8[1048576]{0}', space=vmem, size = 0x100000, scoped, tag = 'input window, operand 1']
    #allocation8 [shape = 's32[2]{0}', space=sflag, size = 0x8, scoped, tag = 'scoped memory for tpu_custom_call.1']
    #allocation9 [shape = 'u8[262144]{0}', space=vmem, size = 0x40000, scoped, tag = 'input window, operand 3, single buffered']
    #allocation10 [shape = 'u8[512]{0}', space=vmem, size = 0x400, scoped, tag = 'output window, operand 0, single buffered']
    %13 = vsyncpa [#allocation5], 0
    %s14 = scalar_lea.sflag [#allocation5], 1
    %15 = vsyncpa %s14, 0
    %16 = vsyncpa [#allocation8], 0
    %s17 = scalar_lea.sflag [#allocation8], 1
    %18 = vsyncpa %s17, 0
    %19 = vsyncpa [#allocation6], 0
    loop: start=0, step=1, limit=4
    $region2: #{tpu_custom_call.1} parent=1 // loop_pre_header
      _
    $region3: #{tpu_custom_call.1} parent=1 // loop_header
      %s21 = sphi 0, %s25
      %p22 = scmp.ge.s32.totalorder %s21, 4
      %s28 = sphi 0, %s40
      %s29 = sphi 0, %s36
      %s30 = sphi 0, %s28
      %s31 = sphi 0, %s29
      %s32 = sphi 0, %s30
      %s33 = sphi 0, %s31
      %s45 = sphi 0, %s47
      %s48 = sphi 0, %s45
      %s49 = sphi 0, %s48
      %s65 = sphi 0, %s49
      %s71 = sphi 0, %s73
      %s74 = sphi 0, %s71
      %s75 = sphi 0, %s74
      %s91 = sphi 0, %s75
      %s95 = sphi 0, %s95
      %s97 = sphi 0, %s95
      %s98 = sphi 0, %s97
      %s112 = sphi 0, %s98
      %s116 = sphi 0, %s116
      %s118 = sphi 0, %s116
      %s119 = sphi 0, %s118
      %s133 = sphi 0, %s119
      %s137 = sphi 0, %s137
      %s139 = sphi 0, %s137
      %s140 = sphi 0, %s139
      %s154 = sphi 0, %s140
      %s158 = sphi 0, %s158
      %s160 = sphi 0, %s158
      %s161 = sphi 0, %s160
      %s175 = sphi 0, %s161
      %s179 = sphi 0, %s179
      %s181 = sphi 0, %s179
      %s182 = sphi 0, %s181
      %s196 = sphi 0, %s182
      %s202 = sphi 0, %s204
      %s205 = sphi 0, %s202
      %s206 = sphi 0, %s205
      %s222 = sphi 0, %s206
    $region4: #{tpu_custom_call.1} parent=1 // loop_header_branch
      %24 = sbr.rel (%p22) target = $region8
    $region5: #{tpu_custom_call.1} parent=1 // loop_body
      %s26 = ssub.s32 %s21, 1
      %s27 = ssub.s32 %s21, 2
      %s34 = sadd.s32 1, %s29
      %p35 = scmp.ge.s32.totalorder %s34, 2
      %s36 = scalar_select %p35, 0, %s34
      %s37 = sadd.s32 1, %s28
      %s38 = scalar_select %p35, %s37, %s28
      %p39 = scmp.ge.s32.totalorder %s38, 1
      %s40 = scalar_select %p39, 0, %s38
      %s41 = ssub.s32 %s28, %s40
      %s42 = ssub.s32 %s29, %s36
      %s43 = sor.u32 %s41, %s42
      %p44 = scmp.eq.s32.totalorder %s43, 0
      %s46 = sadd.s32 %s45, 1
      %s47 = scalar_select %p44, %s45, %s46
      %p50 = pneg %p44
      %p51 = scmp.eq.s32.totalorder %s21, 1
      %p52 = por %p50, %p51
      %p53 = scmp.ne.s32.totalorder %s45, %s48
      %p54 = scmp.eq.s32.totalorder %s21, 0
      %p55 = por %p53, %p54
      %p56 = scmp.ne.s32.totalorder %s45, %s48
      %p57 = scmp.eq.s32.totalorder %s26, 1
      %p58 = por %p56, %p57
      %p59 = scmp.ne.s32.totalorder %s48, %s49
      %p60 = scmp.eq.s32.totalorder %s26, 0
      %p61 = por %p59, %p60
      %p62 = scmp.ne.s32.totalorder %s48, %s49
      %p63 = scmp.eq.s32.totalorder %s27, 1
      %p64 = por %p62, %p63
      %p66 = scmp.ne.s32.totalorder %s49, %s65
      %p67 = scmp.eq.s32.totalorder %s27, 0
      %p68 = por %p66, %p67
      %s69 = ssub.s32 %s29, %s36
      %p70 = scmp.eq.s32.totalorder %s69, 0
      %s72 = sadd.s32 %s71, 1
      %s73 = scalar_select %p70, %s71, %s72
      %p76 = pneg %p70
      %p77 = scmp.eq.s32.totalorder %s21, 1
      %p78 = por %p76, %p77
      %p79 = scmp.ne.s32.totalorder %s71, %s74
      %p80 = scmp.eq.s32.totalorder %s21, 0
      %p81 = por %p79, %p80
      %p82 = scmp.ne.s32.totalorder %s71, %s74
      %p83 = scmp.eq.s32.totalorder %s26, 1
      %p84 = por %p82, %p83
      %p85 = scmp.ne.s32.totalorder %s74, %s75
      %p86 = scmp.eq.s32.totalorder %s26, 0
      %p87 = por %p85, %p86
      %p88 = scmp.ne.s32.totalorder %s74, %s75
      %p89 = scmp.eq.s32.totalorder %s27, 1
      %p90 = por %p88, %p89
      %p92 = scmp.ne.s32.totalorder %s75, %s91
      %p93 = scmp.eq.s32.totalorder %s27, 0
      %p94 = por %p92, %p93
      %s96 = sadd.s32 %s95, 1
      %p99 = scmp.eq.s32.totalorder %s21, 1
      %p100 = scmp.ne.s32.totalorder %s95, %s97
      %p101 = scmp.eq.s32.totalorder %s21, 0
      %p102 = por %p100, %p101
      %p103 = scmp.ne.s32.totalorder %s95, %s97
      %p104 = scmp.eq.s32.totalorder %s26, 1
      %p105 = por %p103, %p104
      %p106 = scmp.ne.s32.totalorder %s97, %s98
      %p107 = scmp.eq.s32.totalorder %s26, 0
      %p108 = por %p106, %p107
      %p109 = scmp.ne.s32.totalorder %s97, %s98
      %p110 = scmp.eq.s32.totalorder %s27, 1
      %p111 = por %p109, %p110
      %p113 = scmp.ne.s32.totalorder %s98, %s112
      %p114 = scmp.eq.s32.totalorder %s27, 0
      %p115 = por %p113, %p114
      %s117 = sadd.s32 %s116, 1
      %p120 = scmp.eq.s32.totalorder %s21, 1
      %p121 = scmp.ne.s32.totalorder %s116, %s118
      %p122 = scmp.eq.s32.totalorder %s21, 0
      %p123 = por %p121, %p122
      %p124 = scmp.ne.s32.totalorder %s116, %s118
      %p125 = scmp.eq.s32.totalorder %s26, 1
      %p126 = por %p124, %p125
      %p127 = scmp.ne.s32.totalorder %s118, %s119
      %p128 = scmp.eq.s32.totalorder %s26, 0
      %p129 = por %p127, %p128
      %p130 = scmp.ne.s32.totalorder %s118, %s119
      %p131 = scmp.eq.s32.totalorder %s27, 1
      %p132 = por %p130, %p131
      %p134 = scmp.ne.s32.totalorder %s119, %s133
      %p135 = scmp.eq.s32.totalorder %s27, 0
      %p136 = por %p134, %p135
      %s138 = sadd.s32 %s137, 1
      %p141 = scmp.eq.s32.totalorder %s21, 1
      %p142 = scmp.ne.s32.totalorder %s137, %s139
      %p143 = scmp.eq.s32.totalorder %s21, 0
      %p144 = por %p142, %p143
      %p145 = scmp.ne.s32.totalorder %s137, %s139
      %p146 = scmp.eq.s32.totalorder %s26, 1
      %p147 = por %p145, %p146
      %p148 = scmp.ne.s32.totalorder %s139, %s140
      %p149 = scmp.eq.s32.totalorder %s26, 0
      %p150 = por %p148, %p149
      %p151 = scmp.ne.s32.totalorder %s139, %s140
      %p152 = scmp.eq.s32.totalorder %s27, 1
      %p153 = por %p151, %p152
      %p155 = scmp.ne.s32.totalorder %s140, %s154
      %p156 = scmp.eq.s32.totalorder %s27, 0
      %p157 = por %p155, %p156
      %s159 = sadd.s32 %s158, 1
      %p162 = scmp.eq.s32.totalorder %s21, 1
      %p163 = scmp.ne.s32.totalorder %s158, %s160
      %p164 = scmp.eq.s32.totalorder %s21, 0
      %p165 = por %p163, %p164
      %p166 = scmp.ne.s32.totalorder %s158, %s160
      %p167 = scmp.eq.s32.totalorder %s26, 1
      %p168 = por %p166, %p167
      %p169 = scmp.ne.s32.totalorder %s160, %s161
      %p170 = scmp.eq.s32.totalorder %s26, 0
      %p171 = por %p169, %p170
      %p172 = scmp.ne.s32.totalorder %s160, %s161
      %p173 = scmp.eq.s32.totalorder %s27, 1
      %p174 = por %p172, %p173
      %p176 = scmp.ne.s32.totalorder %s161, %s175
      %p177 = scmp.eq.s32.totalorder %s27, 0
      %p178 = por %p176, %p177
      %s180 = sadd.s32 %s179, 1
      %p183 = scmp.eq.s32.totalorder %s21, 1
      %p184 = scmp.ne.s32.totalorder %s179, %s181
      %p185 = scmp.eq.s32.totalorder %s21, 0
      %p186 = por %p184, %p185
      %p187 = scmp.ne.s32.totalorder %s179, %s181
      %p188 = scmp.eq.s32.totalorder %s26, 1
      %p189 = por %p187, %p188
      %p190 = scmp.ne.s32.totalorder %s181, %s182
      %p191 = scmp.eq.s32.totalorder %s26, 0
      %p192 = por %p190, %p191
      %p193 = scmp.ne.s32.totalorder %s181, %s182
      %p194 = scmp.eq.s32.totalorder %s27, 1
      %p195 = por %p193, %p194
      %p197 = scmp.ne.s32.totalorder %s182, %s196
      %p198 = scmp.eq.s32.totalorder %s27, 0
      %p199 = por %p197, %p198
      %s200 = ssub.s32 %s28, %s40
      %p201 = scmp.eq.s32.totalorder %s200, 0
      %s203 = sadd.s32 %s202, 1
      %s204 = scalar_select %p201, %s202, %s203
      %p207 = pneg %p201
      %p208 = scmp.eq.s32.totalorder %s21, 1
      %p209 = por %p207, %p208
      %p210 = scmp.ne.s32.totalorder %s202, %s205
      %p211 = scmp.eq.s32.totalorder %s21, 0
      %p212 = por %p210, %p211
      %p213 = scmp.ne.s32.totalorder %s202, %s205
      %p214 = scmp.eq.s32.totalorder %s26, 1
      %p215 = por %p213, %p214
      %p216 = scmp.ne.s32.totalorder %s205, %s206
      %p217 = scmp.eq.s32.totalorder %s26, 0
      %p218 = por %p216, %p217
      %p219 = scmp.ne.s32.totalorder %s205, %s206
      %p220 = scmp.eq.s32.totalorder %s27, 1
      %p221 = por %p219, %p220
      %p223 = scmp.ne.s32.totalorder %s206, %s222
      %p224 = scmp.eq.s32.totalorder %s27, 0
      %p225 = por %p223, %p224
      %p226 = scmp.le.s32.totalorder 1, %s21
      %p227 = scmp.lt.s32.totalorder %s21, 3
      %p228 = pnand %p226, %p227
      %p229 = pneg %p228
      // Predicated region
      $region9: #{tpu_custom_call.1} parent=5 // pred_check
        _
      $region10: #{tpu_custom_call.1} parent=5 // pred_check_branch
        %231 = sbr.rel (%p228) target = $region12
      $region11: #{tpu_custom_call.1} parent=5 // pred_region
        %s232 = ssub.s32 %s21, 1
        // Predicated region
        $region13: #{tpu_custom_call.1} parent=11 // pred_check
          %p233 = pneg %p108
        $region14: #{tpu_custom_call.1} parent=11 // pred_check_branch
          %235 = sbr.rel (%p233) target = $region16
        $region15: #{tpu_custom_call.1} parent=11 // pred_region
          _
        $region16: #{tpu_custom_call.1} parent=11 // pred_fallthru
          _
        // Predicated region
        $region17: #{tpu_custom_call.1} parent=11 // pred_check
          %p236 = pneg %p129
        $region18: #{tpu_custom_call.1} parent=11 // pred_check_branch
          %238 = sbr.rel (%p236) target = $region20
        $region19: #{tpu_custom_call.1} parent=11 // pred_region
          %s240 = ssub.s32 8192, 8192
          %241 = vsyncadd [#allocation8], %s240
          %s242 = sshll.u32 [#allocation9], 4
          %s243 = int_to_ptr.vmem [resolvable:$true] %s242
          %248 = dma.hbm_to_vmem [thread:$0]  %s3, 8192, %s243, [#allocation8], 128, 128, 8
        $region20: #{tpu_custom_call.1} parent=11 // pred_fallthru
          _
        // Predicated region
        $region21: #{tpu_custom_call.1} parent=11 // pred_check
          %p249 = pneg %p150
        $region22: #{tpu_custom_call.1} parent=11 // pred_check_branch
          %251 = sbr.rel (%p249) target = $region24
        $region23: #{tpu_custom_call.1} parent=11 // pred_region
          _
        $region24: #{tpu_custom_call.1} parent=11 // pred_fallthru
          _
        // Predicated region
        $region25: #{tpu_custom_call.1} parent=11 // pred_check
          %p252 = pneg %p171
        $region26: #{tpu_custom_call.1} parent=11 // pred_check_branch
          %254 = sbr.rel (%p252) target = $region28
        $region27: #{tpu_custom_call.1} parent=11 // pred_region
          _
        $region28: #{tpu_custom_call.1} parent=11 // pred_fallthru
          _
        // Predicated region
        $region29: #{tpu_custom_call.1} parent=11 // pred_check
          %p255 = pneg %p192
        $region30: #{tpu_custom_call.1} parent=11 // pred_check_branch
          %257 = sbr.rel (%p255) target = $region32
        $region31: #{tpu_custom_call.1} parent=11 // pred_region
          _
        $region32: #{tpu_custom_call.1} parent=11 // pred_fallthru
          _
      $region12: #{tpu_custom_call.1} parent=5 // pred_fallthru
        _
      %p258 = scmp.lt.s32.totalorder %s21, 2
      // Predicated region
      $region33: #{tpu_custom_call.1} parent=5 // pred_check
        %p259 = pneg %p258
      $region34: #{tpu_custom_call.1} parent=5 // pred_check_branch
        %261 = sbr.rel (%p259) target = $region36
      $region35: #{tpu_custom_call.1} parent=5 // pred_region
        // Predicated region
        $region37: #{tpu_custom_call.1} parent=35 // pred_check
          %p262 = pneg %p55
        $region38: #{tpu_custom_call.1} parent=35 // pred_check_branch
          %264 = sbr.rel (%p262) target = $region40
        $region39: #{tpu_custom_call.1} parent=35 // pred_region
          %s265 = sand.u32 %s45, 1
          %s266 = scalar_lea.sflag [#allocation5], %s265
          %s267 = sand.u32 %s45, 1
          %s268 = smul.addr %s267, 32
          %s269 = scalar_lea.vmem [#allocation4], %s268
          %s270 = smul.u32 2, %s28
          %s271 = smul.u32 4, %s29
          %s273 = ssub.s32 512, 512
          %274 = vsyncadd %s266, %s273
          %s275 = smul.addr %s270, 8
          %s276 = sadd.s32 %s271, %s275
          %s277 = smul.addr %s276, 64
          %s278 = scalar_lea.hbm %s0, %s277
          %s279 = sshll.u32 %s269, 4
          %s280 = int_to_ptr.vmem [resolvable:$true] %s279
          %285 = dma.hbm_to_vmem [thread:$0]  %s278, 512, %s280, %s266, 512, 256, 16
        $region40: #{tpu_custom_call.1} parent=35 // pred_fallthru
          _
        // Predicated region
        $region41: #{tpu_custom_call.1} parent=35 // pred_check
          %p286 = pneg %p81
        $region42: #{tpu_custom_call.1} parent=35 // pred_check_branch
          %288 = sbr.rel (%p286) target = $region44
        $region43: #{tpu_custom_call.1} parent=35 // pred_region
          %s289 = sand.u32 %s21, 1
          %s290 = scalar_lea.sflag [#allocation8], %s289
          %s291 = sand.u32 %s71, 1
          %s292 = smul.addr %s291, 1024
          %s293 = scalar_lea.vmem [#allocation7], %s292
          %s294 = smul.u32 64, %s29
          %s296 = ssub.s32 16384, 16384
          %297 = vsyncadd %s290, %s296
          %s298 = smul.addr %s294, 4
          %s299 = smul.addr %s298, 64
          %s300 = scalar_lea.hbm %s1, %s299
          %s301 = sshll.u32 %s293, 4
          %s302 = int_to_ptr.vmem [resolvable:$true] %s301
          %307 = dma.hbm_to_vmem [thread:$0]  %s300, 16384, %s302, %s290, 256, 256, 16
        $region44: #{tpu_custom_call.1} parent=35 // pred_fallthru
          _
      $region36: #{tpu_custom_call.1} parent=5 // pred_fallthru
        _
      %p308 = scmp.le.s32.totalorder 1, %s21
      %p309 = scmp.lt.s32.totalorder %s21, 3
      %p310 = pnand %p308, %p309
      %p311 = pneg %p310
      // Predicated region
      $region45: #{tpu_custom_call.1} parent=5 // pred_check
        _
      $region46: #{tpu_custom_call.1} parent=5 // pred_check_branch
        %313 = sbr.rel (%p310) target = $region48
      $region47: #{tpu_custom_call.1} parent=5 // pred_region
        %s314 = ssub.s32 %s21, 1
        %s315 = sand.u32 %s48, 1
        %s316 = scalar_lea.sflag [#allocation5], %s315
        %s317 = sand.u32 %s48, 1
        %s318 = smul.addr %s317, 32
        %s319 = scalar_lea.vmem [#allocation4], %s318
        // Predicated region
        $region49: #{tpu_custom_call.1} parent=47 // pred_check
          %p320 = pneg %p61
        $region50: #{tpu_custom_call.1} parent=47 // pred_check_branch
          %322 = sbr.rel (%p320) target = $region52
        $region51: #{tpu_custom_call.1} parent=47 // pred_region
          %323 = dma.done %s316, 512
        $region52: #{tpu_custom_call.1} parent=47 // pred_fallthru
          _
        %s324 = sand.u32 %s26, 1
        %s325 = scalar_lea.sflag [#allocation8], %s324
        %s326 = sand.u32 %s74, 1
        %s327 = smul.addr %s326, 1024
        %s328 = scalar_lea.vmem [#allocation7], %s327
        // Predicated region
        $region53: #{tpu_custom_call.1} parent=47 // pred_check
          %p329 = pneg %p87
        $region54: #{tpu_custom_call.1} parent=47 // pred_check_branch
          %331 = sbr.rel (%p329) target = $region56
        $region55: #{tpu_custom_call.1} parent=47 // pred_region
          %332 = dma.done %s325, 16384
        $region56: #{tpu_custom_call.1} parent=47 // pred_fallthru
          _
        // Predicated region
        $region57: #{tpu_custom_call.1} parent=47 // pred_check
          %p333 = pneg %p129
        $region58: #{tpu_custom_call.1} parent=47 // pred_check_branch
          %335 = sbr.rel (%p333) target = $region60
        $region59: #{tpu_custom_call.1} parent=47 // pred_region
          %336 = dma.done [#allocation8], 8192
        $region60: #{tpu_custom_call.1} parent=47 // pred_fallthru
          _
        %s337 = sand.u32 %s48, 1
        %s338 = scalar_lea.sflag [#allocation5], %s337
        %s339 = sand.u32 %s48, 1
        %s340 = smul.addr %s339, 32
        %s341 = scalar_lea.vmem [#allocation4], %s340
        %p342 = pneg %p61
        %p343 = pneg %p58
        %s344 = sand.u32 %s26, 1
        %s345 = scalar_lea.sflag [#allocation8], %s344
        %s346 = sand.u32 %s74, 1
        %s347 = smul.addr %s346, 1024
        %s348 = scalar_lea.vmem [#allocation7], %s347
        %p349 = pneg %p87
        %p350 = pneg %p84
        %p351 = pneg %p108
        %p352 = pneg %p105
        %p353 = pneg %p129
        %p354 = pneg %p126
        %p355 = pneg %p150
        %p356 = pneg %p147
        %p357 = pneg %p171
        %p358 = pneg %p168
        %p359 = pneg %p192
        %p360 = pneg %p189
        %p361 = pneg %p218
        %p362 = pneg %p215
        %s363 = smul.u32 2, %s30
        %s364 = smul.u32 4, %s31
        %s365 = smul.u32 64, %s31
        %p367 = scmp.eq.s32.totalorder %s31, 0
        // Predicated region
        $region61: #{tpu_custom_call.1} parent=47 // pred_check
          %p368 = pneg %p367
        $region62: #{tpu_custom_call.1} parent=47 // pred_check_branch
          %370 = sbr.rel (%p368) target = $region64
        $region63: #{tpu_custom_call.1} parent=47 // pred_region
          %371 = vst [vmem:[#allocation2] sm:$0xff] 0.0
          %372 = vst [vmem:[#allocation2 + $0x8] sm:$0xff] 0.0
          %373 = vst [vmem:[#allocation2 + $0x10] sm:$0xff] 0.0
          %374 = vst [vmem:[#allocation2 + $0x18] sm:$0xff] 0.0
          %375 = vst [vmem:[#allocation2 + $0x20] sm:$0xff] 0.0
          %376 = vst [vmem:[#allocation2 + $0x28] sm:$0xff] 0.0
          %377 = vst [vmem:[#allocation2 + $0x30] sm:$0xff] 0.0
          %378 = vst [vmem:[#allocation2 + $0x38] sm:$0xff] 0.0
        $region64: #{tpu_custom_call.1} parent=47 // pred_fallthru
          _
        %v379 = vld [vmem:[#allocation2] sm:$0xff]
        %v380 = vld [vmem:[#allocation2 + $0x8] sm:$0xff]
        %v381 = vld [vmem:[#allocation2 + $0x10] sm:$0xff]
        %v382 = vld [vmem:[#allocation2 + $0x18] sm:$0xff]
        %v383 = vld [vmem:[#allocation2 + $0x20] sm:$0xff]
        %v384 = vld [vmem:[#allocation2 + $0x28] sm:$0xff]
        %v385 = vld [vmem:[#allocation2 + $0x30] sm:$0xff]
        %v386 = vld [vmem:[#allocation2 + $0x38] sm:$0xff]
        %v387 = vld [vmem:[%s319] sm:$0xff]
        %v388 = vld [vmem:[%s319 + $0x8] sm:$0xff]
        %v389 = vld [vmem:[%s319 + $0x10] sm:$0xff]
        %v390 = vld [vmem:[%s319 + $0x18] sm:$0xff]
        %v391 = vld [vmem:[%s328] sm:$0xff]
        %v392 = vld [vmem:[%s328 + $0x8] sm:$0xff]
        %v393 = vld [vmem:[%s328 + $0x10] sm:$0xff]
        %v394 = vld [vmem:[%s328 + $0x18] sm:$0xff]
        %v395 = vld [vmem:[%s328 + $0x20] sm:$0xff]
        %v396 = vld [vmem:[%s328 + $0x28] sm:$0xff]
        %v397 = vld [vmem:[%s328 + $0x30] sm:$0xff]
        %v398 = vld [vmem:[%s328 + $0x38] sm:$0xff]
        %v399 = vld [vmem:[%s328 + $0x40] sm:$0xff]
        %v400 = vld [vmem:[%s328 + $0x48] sm:$0xff]
        %v401 = vld [vmem:[%s328 + $0x50] sm:$0xff]
        %v402 = vld [vmem:[%s328 + $0x58] sm:$0xff]
        %v403 = vld [vmem:[%s328 + $0x60] sm:$0xff]
        %v404 = vld [vmem:[%s328 + $0x68] sm:$0xff]
        %v405 = vld [vmem:[%s328 + $0x70] sm:$0xff]
        %v406 = vld [vmem:[%s328 + $0x78] sm:$0xff]
        %v407 = vld [vmem:[%s328 + $0x80] sm:$0xff]
        %v408 = vld [vmem:[%s328 + $0x88] sm:$0xff]
        %v409 = vld [vmem:[%s328 + $0x90] sm:$0xff]
        %v410 = vld [vmem:[%s328 + $0x98] sm:$0xff]
        %v411 = vld [vmem:[%s328 + $0xa0] sm:$0xff]
        %v412 = vld [vmem:[%s328 + $0xa8] sm:$0xff]
        %v413 = vld [vmem:[%s328 + $0xb0] sm:$0xff]
        %v414 = vld [vmem:[%s328 + $0xb8] sm:$0xff]
        %v415 = vld [vmem:[%s328 + $0xc0] sm:$0xff]
        %v416 = vld [vmem:[%s328 + $0xc8] sm:$0xff]
        %v417 = vld [vmem:[%s328 + $0xd0] sm:$0xff]
        %v418 = vld [vmem:[%s328 + $0xd8] sm:$0xff]
        %v419 = vld [vmem:[%s328 + $0xe0] sm:$0xff]
        %v420 = vld [vmem:[%s328 + $0xe8] sm:$0xff]
        %v421 = vld [vmem:[%s328 + $0xf0] sm:$0xff]
        %v422 = vld [vmem:[%s328 + $0xf8] sm:$0xff]
        %v423 = vld [vmem:[%s328 + $0x100] sm:$0xff]
        %v424 = vld [vmem:[%s328 + $0x108] sm:$0xff]
        %v425 = vld [vmem:[%s328 + $0x110] sm:$0xff]
        %v426 = vld [vmem:[%s328 + $0x118] sm:$0xff]
        %v427 = vld [vmem:[%s328 + $0x120] sm:$0xff]
        %v428 = vld [vmem:[%s328 + $0x128] sm:$0xff]
        %v429 = vld [vmem:[%s328 + $0x130] sm:$0xff]
        %v430 = vld [vmem:[%s328 + $0x138] sm:$0xff]
        %v431 = vld [vmem:[%s328 + $0x140] sm:$0xff]
        %v432 = vld [vmem:[%s328 + $0x148] sm:$0xff]
        %v433 = vld [vmem:[%s328 + $0x150] sm:$0xff]
        %v434 = vld [vmem:[%s328 + $0x158] sm:$0xff]
        %v435 = vld [vmem:[%s328 + $0x160] sm:$0xff]
        %v436 = vld [vmem:[%s328 + $0x168] sm:$0xff]
        %v437 = vld [vmem:[%s328 + $0x170] sm:$0xff]
        %v438 = vld [vmem:[%s328 + $0x178] sm:$0xff]
        %v439 = vld [vmem:[%s328 + $0x180] sm:$0xff]
        %v440 = vld [vmem:[%s328 + $0x188] sm:$0xff]
        %v441 = vld [vmem:[%s328 + $0x190] sm:$0xff]
        %v442 = vld [vmem:[%s328 + $0x198] sm:$0xff]
        %v443 = vld [vmem:[%s328 + $0x1a0] sm:$0xff]
        %v444 = vld [vmem:[%s328 + $0x1a8] sm:$0xff]
        %v445 = vld [vmem:[%s328 + $0x1b0] sm:$0xff]
        %v446 = vld [vmem:[%s328 + $0x1b8] sm:$0xff]
        %v447 = vld [vmem:[%s328 + $0x1c0] sm:$0xff]
        %v448 = vld [vmem:[%s328 + $0x1c8] sm:$0xff]
        %v449 = vld [vmem:[%s328 + $0x1d0] sm:$0xff]
        %v450 = vld [vmem:[%s328 + $0x1d8] sm:$0xff]
        %v451 = vld [vmem:[%s328 + $0x1e0] sm:$0xff]
        %v452 = vld [vmem:[%s328 + $0x1e8] sm:$0xff]
        %v453 = vld [vmem:[%s328 + $0x1f0] sm:$0xff]
        %v454 = vld [vmem:[%s328 + $0x1f8] sm:$0xff]
        %v455 = vld [vmem:[%s328 + $0x200] sm:$0xff]
        %v456 = vld [vmem:[%s328 + $0x208] sm:$0xff]
        %v457 = vld [vmem:[%s328 + $0x210] sm:$0xff]
        %v458 = vld [vmem:[%s328 + $0x218] sm:$0xff]
        %v459 = vld [vmem:[%s328 + $0x220] sm:$0xff]
        %v460 = vld [vmem:[%s328 + $0x228] sm:$0xff]
        %v461 = vld [vmem:[%s328 + $0x230] sm:$0xff]
        %v462 = vld [vmem:[%s328 + $0x238] sm:$0xff]
        %v463 = vld [vmem:[%s328 + $0x240] sm:$0xff]
        %v464 = vld [vmem:[%s328 + $0x248] sm:$0xff]
        %v465 = vld [vmem:[%s328 + $0x250] sm:$0xff]
        %v466 = vld [vmem:[%s328 + $0x258] sm:$0xff]
        %v467 = vld [vmem:[%s328 + $0x260] sm:$0xff]
        %v468 = vld [vmem:[%s328 + $0x268] sm:$0xff]
        %v469 = vld [vmem:[%s328 + $0x270] sm:$0xff]
        %v470 = vld [vmem:[%s328 + $0x278] sm:$0xff]
        %v471 = vld [vmem:[%s328 + $0x280] sm:$0xff]
        %v472 = vld [vmem:[%s328 + $0x288] sm:$0xff]
        %v473 = vld [vmem:[%s328 + $0x290] sm:$0xff]
        %v474 = vld [vmem:[%s328 + $0x298] sm:$0xff]
        %v475 = vld [vmem:[%s328 + $0x2a0] sm:$0xff]
        %v476 = vld [vmem:[%s328 + $0x2a8] sm:$0xff]
        %v477 = vld [vmem:[%s328 + $0x2b0] sm:$0xff]
        %v478 = vld [vmem:[%s328 + $0x2b8] sm:$0xff]
        %v479 = vld [vmem:[%s328 + $0x2c0] sm:$0xff]
        %v480 = vld [vmem:[%s328 + $0x2c8] sm:$0xff]
        %v481 = vld [vmem:[%s328 + $0x2d0] sm:$0xff]
        %v482 = vld [vmem:[%s328 + $0x2d8] sm:$0xff]
        %v483 = vld [vmem:[%s328 + $0x2e0] sm:$0xff]
        %v484 = vld [vmem:[%s328 + $0x2e8] sm:$0xff]
        %v485 = vld [vmem:[%s328 + $0x2f0] sm:$0xff]
        %v486 = vld [vmem:[%s328 + $0x2f8] sm:$0xff]
        %v487 = vld [vmem:[%s328 + $0x300] sm:$0xff]
        %v488 = vld [vmem:[%s328 + $0x308] sm:$0xff]
        %v489 = vld [vmem:[%s328 + $0x310] sm:$0xff]
        %v490 = vld [vmem:[%s328 + $0x318] sm:$0xff]
        %v491 = vld [vmem:[%s328 + $0x320] sm:$0xff]
        %v492 = vld [vmem:[%s328 + $0x328] sm:$0xff]
        %v493 = vld [vmem:[%s328 + $0x330] sm:$0xff]
        %v494 = vld [vmem:[%s328 + $0x338] sm:$0xff]
        %v495 = vld [vmem:[%s328 + $0x340] sm:$0xff]
        %v496 = vld [vmem:[%s328 + $0x348] sm:$0xff]
        %v497 = vld [vmem:[%s328 + $0x350] sm:$0xff]
        %v498 = vld [vmem:[%s328 + $0x358] sm:$0xff]
        %v499 = vld [vmem:[%s328 + $0x360] sm:$0xff]
        %v500 = vld [vmem:[%s328 + $0x368] sm:$0xff]
        %v501 = vld [vmem:[%s328 + $0x370] sm:$0xff]
        %v502 = vld [vmem:[%s328 + $0x378] sm:$0xff]
        %v503 = vld [vmem:[%s328 + $0x380] sm:$0xff]
        %v504 = vld [vmem:[%s328 + $0x388] sm:$0xff]
        %v505 = vld [vmem:[%s328 + $0x390] sm:$0xff]
        %v506 = vld [vmem:[%s328 + $0x398] sm:$0xff]
        %v507 = vld [vmem:[%s328 + $0x3a0] sm:$0xff]
        %v508 = vld [vmem:[%s328 + $0x3a8] sm:$0xff]
        %v509 = vld [vmem:[%s328 + $0x3b0] sm:$0xff]
        %v510 = vld [vmem:[%s328 + $0x3b8] sm:$0xff]
        %v511 = vld [vmem:[%s328 + $0x3c0] sm:$0xff]
        %v512 = vld [vmem:[%s328 + $0x3c8] sm:$0xff]
        %v513 = vld [vmem:[%s328 + $0x3d0] sm:$0xff]
        %v514 = vld [vmem:[%s328 + $0x3d8] sm:$0xff]
        %v515 = vld [vmem:[%s328 + $0x3e0] sm:$0xff]
        %v516 = vld [vmem:[%s328 + $0x3e8] sm:$0xff]
        %v517 = vld [vmem:[%s328 + $0x3f0] sm:$0xff]
        %v518 = vld [vmem:[%s328 + $0x3f8] sm:$0xff]
        %v523 = vunpack.c.l.b16 %v387
        %v524 = vunpack.c.h.b16 %v387
        %v525 = vunpack.c.l.b16 %v388
        %v526 = vunpack.c.h.b16 %v388
        %v527 = vunpack.c.l.b16 %v389
        %v528 = vunpack.c.h.b16 %v389
        %v529 = vunpack.c.l.b16 %v390
        %v530 = vunpack.c.h.b16 %v390
        %v531 = vpack.c.b16 %v527, %v523
        %v532 = vpack.c.b16 %v528, %v524
        %v533 = vpack.c.b16 %v529, %v525
        %v534 = vpack.c.b16 %v530, %v526
        %v667 = vunpack.c.l.b16 %v391
        %v668 = vunpack.c.h.b16 %v391
        %v669 = vunpack.c.l.b16 %v392
        %v670 = vunpack.c.h.b16 %v392
        %v671 = vunpack.c.l.b16 %v393
        %v672 = vunpack.c.h.b16 %v393
        %v673 = vunpack.c.l.b16 %v394
        %v674 = vunpack.c.h.b16 %v394
        %v675 = vunpack.c.l.b16 %v395
        %v676 = vunpack.c.h.b16 %v395
        %v677 = vunpack.c.l.b16 %v396
        %v678 = vunpack.c.h.b16 %v396
        %v679 = vunpack.c.l.b16 %v397
        %v680 = vunpack.c.h.b16 %v397
        %v681 = vunpack.c.l.b16 %v398
        %v682 = vunpack.c.h.b16 %v398
        %v683 = vunpack.c.l.b16 %v399
        %v684 = vunpack.c.h.b16 %v399
        %v685 = vunpack.c.l.b16 %v400
        %v686 = vunpack.c.h.b16 %v400
        %v687 = vunpack.c.l.b16 %v401
        %v688 = vunpack.c.h.b16 %v401
        %v689 = vunpack.c.l.b16 %v402
        %v690 = vunpack.c.h.b16 %v402
        %v691 = vunpack.c.l.b16 %v403
        %v692 = vunpack.c.h.b16 %v403
        %v693 = vunpack.c.l.b16 %v404
        %v694 = vunpack.c.h.b16 %v404
        %v695 = vunpack.c.l.b16 %v405
        %v696 = vunpack.c.h.b16 %v405
        %v697 = vunpack.c.l.b16 %v406
        %v698 = vunpack.c.h.b16 %v406
        %v699 = vunpack.c.l.b16 %v407
        %v700 = vunpack.c.h.b16 %v407
        %v701 = vunpack.c.l.b16 %v408
        %v702 = vunpack.c.h.b16 %v408
        %v703 = vunpack.c.l.b16 %v409
        %v704 = vunpack.c.h.b16 %v409
        %v705 = vunpack.c.l.b16 %v410
        %v706 = vunpack.c.h.b16 %v410
        %v707 = vunpack.c.l.b16 %v411
        %v708 = vunpack.c.h.b16 %v411
        %v709 = vunpack.c.l.b16 %v412
        %v710 = vunpack.c.h.b16 %v412
        %v711 = vunpack.c.l.b16 %v413
        %v712 = vunpack.c.h.b16 %v413
        %v713 = vunpack.c.l.b16 %v414
        %v714 = vunpack.c.h.b16 %v414
        %v715 = vunpack.c.l.b16 %v415
        %v716 = vunpack.c.h.b16 %v415
        %v717 = vunpack.c.l.b16 %v416
        %v718 = vunpack.c.h.b16 %v416
        %v719 = vunpack.c.l.b16 %v417
        %v720 = vunpack.c.h.b16 %v417
        %v721 = vunpack.c.l.b16 %v418
        %v722 = vunpack.c.h.b16 %v418
        %v723 = vunpack.c.l.b16 %v419
        %v724 = vunpack.c.h.b16 %v419
        %v725 = vunpack.c.l.b16 %v420
        %v726 = vunpack.c.h.b16 %v420
        %v727 = vunpack.c.l.b16 %v421
        %v728 = vunpack.c.h.b16 %v421
        %v729 = vunpack.c.l.b16 %v422
        %v730 = vunpack.c.h.b16 %v422
        %v731 = vunpack.c.l.b16 %v423
        %v732 = vunpack.c.h.b16 %v423
        %v733 = vunpack.c.l.b16 %v424
        %v734 = vunpack.c.h.b16 %v424
        %v735 = vunpack.c.l.b16 %v425
        %v736 = vunpack.c.h.b16 %v425
        %v737 = vunpack.c.l.b16 %v426
        %v738 = vunpack.c.h.b16 %v426
        %v739 = vunpack.c.l.b16 %v427
        %v740 = vunpack.c.h.b16 %v427
        %v741 = vunpack.c.l.b16 %v428
        %v742 = vunpack.c.h.b16 %v428
        %v743 = vunpack.c.l.b16 %v429
        %v744 = vunpack.c.h.b16 %v429
        %v745 = vunpack.c.l.b16 %v430
        %v746 = vunpack.c.h.b16 %v430
        %v747 = vunpack.c.l.b16 %v431
        %v748 = vunpack.c.h.b16 %v431
        %v749 = vunpack.c.l.b16 %v432
        %v750 = vunpack.c.h.b16 %v432
        %v751 = vunpack.c.l.b16 %v433
        %v752 = vunpack.c.h.b16 %v433
        %v753 = vunpack.c.l.b16 %v434
        %v754 = vunpack.c.h.b16 %v434
        %v755 = vunpack.c.l.b16 %v435
        %v756 = vunpack.c.h.b16 %v435
        %v757 = vunpack.c.l.b16 %v436
        %v758 = vunpack.c.h.b16 %v436
        %v759 = vunpack.c.l.b16 %v437
        %v760 = vunpack.c.h.b16 %v437
        %v761 = vunpack.c.l.b16 %v438
        %v762 = vunpack.c.h.b16 %v438
        %v763 = vunpack.c.l.b16 %v439
        %v764 = vunpack.c.h.b16 %v439
        %v765 = vunpack.c.l.b16 %v440
        %v766 = vunpack.c.h.b16 %v440
        %v767 = vunpack.c.l.b16 %v441
        %v768 = vunpack.c.h.b16 %v441
        %v769 = vunpack.c.l.b16 %v442
        %v770 = vunpack.c.h.b16 %v442
        %v771 = vunpack.c.l.b16 %v443
        %v772 = vunpack.c.h.b16 %v443
        %v773 = vunpack.c.l.b16 %v444
        %v774 = vunpack.c.h.b16 %v444
        %v775 = vunpack.c.l.b16 %v445
        %v776 = vunpack.c.h.b16 %v445
        %v777 = vunpack.c.l.b16 %v446
        %v778 = vunpack.c.h.b16 %v446
        %v779 = vunpack.c.l.b16 %v447
        %v780 = vunpack.c.h.b16 %v447
        %v781 = vunpack.c.l.b16 %v448
        %v782 = vunpack.c.h.b16 %v448
        %v783 = vunpack.c.l.b16 %v449
        %v784 = vunpack.c.h.b16 %v449
        %v785 = vunpack.c.l.b16 %v450
        %v786 = vunpack.c.h.b16 %v450
        %v787 = vunpack.c.l.b16 %v451
        %v788 = vunpack.c.h.b16 %v451
        %v789 = vunpack.c.l.b16 %v452
        %v790 = vunpack.c.h.b16 %v452
        %v791 = vunpack.c.l.b16 %v453
        %v792 = vunpack.c.h.b16 %v453
        %v793 = vunpack.c.l.b16 %v454
        %v794 = vunpack.c.h.b16 %v454
        %v795 = vunpack.c.l.b16 %v455
        %v796 = vunpack.c.h.b16 %v455
        %v797 = vunpack.c.l.b16 %v456
        %v798 = vunpack.c.h.b16 %v456
        %v799 = vunpack.c.l.b16 %v457
        %v800 = vunpack.c.h.b16 %v457
        %v801 = vunpack.c.l.b16 %v458
        %v802 = vunpack.c.h.b16 %v458
        %v803 = vunpack.c.l.b16 %v459
        %v804 = vunpack.c.h.b16 %v459
        %v805 = vunpack.c.l.b16 %v460
        %v806 = vunpack.c.h.b16 %v460
        %v807 = vunpack.c.l.b16 %v461
        %v808 = vunpack.c.h.b16 %v461
        %v809 = vunpack.c.l.b16 %v462
        %v810 = vunpack.c.h.b16 %v462
        %v811 = vunpack.c.l.b16 %v463
        %v812 = vunpack.c.h.b16 %v463
        %v813 = vunpack.c.l.b16 %v464
        %v814 = vunpack.c.h.b16 %v464
        %v815 = vunpack.c.l.b16 %v465
        %v816 = vunpack.c.h.b16 %v465
        %v817 = vunpack.c.l.b16 %v466
        %v818 = vunpack.c.h.b16 %v466
        %v819 = vunpack.c.l.b16 %v467
        %v820 = vunpack.c.h.b16 %v467
        %v821 = vunpack.c.l.b16 %v468
        %v822 = vunpack.c.h.b16 %v468
        %v823 = vunpack.c.l.b16 %v469
        %v824 = vunpack.c.h.b16 %v469
        %v825 = vunpack.c.l.b16 %v470
        %v826 = vunpack.c.h.b16 %v470
        %v827 = vunpack.c.l.b16 %v471
        %v828 = vunpack.c.h.b16 %v471
        %v829 = vunpack.c.l.b16 %v472
        %v830 = vunpack.c.h.b16 %v472
        %v831 = vunpack.c.l.b16 %v473
        %v832 = vunpack.c.h.b16 %v473
        %v833 = vunpack.c.l.b16 %v474
        %v834 = vunpack.c.h.b16 %v474
        %v835 = vunpack.c.l.b16 %v475
        %v836 = vunpack.c.h.b16 %v475
        %v837 = vunpack.c.l.b16 %v476
        %v838 = vunpack.c.h.b16 %v476
        %v839 = vunpack.c.l.b16 %v477
        %v840 = vunpack.c.h.b16 %v477
        %v841 = vunpack.c.l.b16 %v478
        %v842 = vunpack.c.h.b16 %v478
        %v843 = vunpack.c.l.b16 %v479
        %v844 = vunpack.c.h.b16 %v479
        %v845 = vunpack.c.l.b16 %v480
        %v846 = vunpack.c.h.b16 %v480
        %v847 = vunpack.c.l.b16 %v481
        %v848 = vunpack.c.h.b16 %v481
        %v849 = vunpack.c.l.b16 %v482
        %v850 = vunpack.c.h.b16 %v482
        %v851 = vunpack.c.l.b16 %v483
        %v852 = vunpack.c.h.b16 %v483
        %v853 = vunpack.c.l.b16 %v484
        %v854 = vunpack.c.h.b16 %v484
        %v855 = vunpack.c.l.b16 %v485
        %v856 = vunpack.c.h.b16 %v485
        %v857 = vunpack.c.l.b16 %v486
        %v858 = vunpack.c.h.b16 %v486
        %v859 = vunpack.c.l.b16 %v487
        %v860 = vunpack.c.h.b16 %v487
        %v861 = vunpack.c.l.b16 %v488
        %v862 = vunpack.c.h.b16 %v488
        %v863 = vunpack.c.l.b16 %v489
        %v864 = vunpack.c.h.b16 %v489
        %v865 = vunpack.c.l.b16 %v490
        %v866 = vunpack.c.h.b16 %v490
        %v867 = vunpack.c.l.b16 %v491
        %v868 = vunpack.c.h.b16 %v491
        %v869 = vunpack.c.l.b16 %v492
        %v870 = vunpack.c.h.b16 %v492
        %v871 = vunpack.c.l.b16 %v493
        %v872 = vunpack.c.h.b16 %v493
        %v873 = vunpack.c.l.b16 %v494
        %v874 = vunpack.c.h.b16 %v494
        %v875 = vunpack.c.l.b16 %v495
        %v876 = vunpack.c.h.b16 %v495
        %v877 = vunpack.c.l.b16 %v496
        %v878 = vunpack.c.h.b16 %v496
        %v879 = vunpack.c.l.b16 %v497
        %v880 = vunpack.c.h.b16 %v497
        %v881 = vunpack.c.l.b16 %v498
        %v882 = vunpack.c.h.b16 %v498
        %v883 = vunpack.c.l.b16 %v499
        %v884 = vunpack.c.h.b16 %v499
        %v885 = vunpack.c.l.b16 %v500
        %v886 = vunpack.c.h.b16 %v500
        %v887 = vunpack.c.l.b16 %v501
        %v888 = vunpack.c.h.b16 %v501
        %v889 = vunpack.c.l.b16 %v502
        %v890 = vunpack.c.h.b16 %v502
        %v891 = vunpack.c.l.b16 %v503
        %v892 = vunpack.c.h.b16 %v503
        %v893 = vunpack.c.l.b16 %v504
        %v894 = vunpack.c.h.b16 %v504
        %v895 = vunpack.c.l.b16 %v505
        %v896 = vunpack.c.h.b16 %v505
        %v897 = vunpack.c.l.b16 %v506
        %v898 = vunpack.c.h.b16 %v506
        %v899 = vunpack.c.l.b16 %v507
        %v900 = vunpack.c.h.b16 %v507
        %v901 = vunpack.c.l.b16 %v508
        %v902 = vunpack.c.h.b16 %v508
        %v903 = vunpack.c.l.b16 %v509
        %v904 = vunpack.c.h.b16 %v509
        %v905 = vunpack.c.l.b16 %v510
        %v906 = vunpack.c.h.b16 %v510
        %v907 = vunpack.c.l.b16 %v511
        %v908 = vunpack.c.h.b16 %v511
        %v909 = vunpack.c.l.b16 %v512
        %v910 = vunpack.c.h.b16 %v512
        %v911 = vunpack.c.l.b16 %v513
        %v912 = vunpack.c.h.b16 %v513
        %v913 = vunpack.c.l.b16 %v514
        %v914 = vunpack.c.h.b16 %v514
        %v915 = vunpack.c.l.b16 %v515
        %v916 = vunpack.c.h.b16 %v515
        %v917 = vunpack.c.l.b16 %v516
        %v918 = vunpack.c.h.b16 %v516
        %v919 = vunpack.c.l.b16 %v517
        %v920 = vunpack.c.h.b16 %v517
        %v921 = vunpack.c.l.b16 %v518
        %v922 = vunpack.c.h.b16 %v518
        %v923 = vpack.c.b16 %v671, %v667
        %v924 = vpack.c.b16 %v672, %v668
        %v925 = vpack.c.b16 %v673, %v669
        %v926 = vpack.c.b16 %v674, %v670
        %v927 = vpack.c.b16 %v679, %v675
        %v928 = vpack.c.b16 %v680, %v676
        %v929 = vpack.c.b16 %v681, %v677
        %v930 = vpack.c.b16 %v682, %v678
        %v931 = vpack.c.b16 %v687, %v683
        %v932 = vpack.c.b16 %v688, %v684
        %v933 = vpack.c.b16 %v689, %v685
        %v934 = vpack.c.b16 %v690, %v686
        %v935 = vpack.c.b16 %v695, %v691
        %v936 = vpack.c.b16 %v696, %v692
        %v937 = vpack.c.b16 %v697, %v693
        %v938 = vpack.c.b16 %v698, %v694
        %v939 = vpack.c.b16 %v703, %v699
        %v940 = vpack.c.b16 %v704, %v700
        %v941 = vpack.c.b16 %v705, %v701
        %v942 = vpack.c.b16 %v706, %v702
        %v943 = vpack.c.b16 %v711, %v707
        %v944 = vpack.c.b16 %v712, %v708
        %v945 = vpack.c.b16 %v713, %v709
        %v946 = vpack.c.b16 %v714, %v710
        %v947 = vpack.c.b16 %v719, %v715
        %v948 = vpack.c.b16 %v720, %v716
        %v949 = vpack.c.b16 %v721, %v717
        %v950 = vpack.c.b16 %v722, %v718
        %v951 = vpack.c.b16 %v727, %v723
        %v952 = vpack.c.b16 %v728, %v724
        %v953 = vpack.c.b16 %v729, %v725
        %v954 = vpack.c.b16 %v730, %v726
        %v955 = vpack.c.b16 %v735, %v731
        %v956 = vpack.c.b16 %v736, %v732
        %v957 = vpack.c.b16 %v737, %v733
        %v958 = vpack.c.b16 %v738, %v734
        %v959 = vpack.c.b16 %v743, %v739
        %v960 = vpack.c.b16 %v744, %v740
        %v961 = vpack.c.b16 %v745, %v741
        %v962 = vpack.c.b16 %v746, %v742
        %v963 = vpack.c.b16 %v751, %v747
        %v964 = vpack.c.b16 %v752, %v748
        %v965 = vpack.c.b16 %v753, %v749
        %v966 = vpack.c.b16 %v754, %v750
        %v967 = vpack.c.b16 %v759, %v755
        %v968 = vpack.c.b16 %v760, %v756
        %v969 = vpack.c.b16 %v761, %v757
        %v970 = vpack.c.b16 %v762, %v758
        %v971 = vpack.c.b16 %v767, %v763
        %v972 = vpack.c.b16 %v768, %v764
        %v973 = vpack.c.b16 %v769, %v765
        %v974 = vpack.c.b16 %v770, %v766
        %v975 = vpack.c.b16 %v775, %v771
        %v976 = vpack.c.b16 %v776, %v772
        %v977 = vpack.c.b16 %v777, %v773
        %v978 = vpack.c.b16 %v778, %v774
        %v979 = vpack.c.b16 %v783, %v779
        %v980 = vpack.c.b16 %v784, %v780
        %v981 = vpack.c.b16 %v785, %v781
        %v982 = vpack.c.b16 %v786, %v782
        %v983 = vpack.c.b16 %v791, %v787
        %v984 = vpack.c.b16 %v792, %v788
        %v985 = vpack.c.b16 %v793, %v789
        %v986 = vpack.c.b16 %v794, %v790
        %v987 = vpack.c.b16 %v799, %v795
        %v988 = vpack.c.b16 %v800, %v796
        %v989 = vpack.c.b16 %v801, %v797
        %v990 = vpack.c.b16 %v802, %v798
        %v991 = vpack.c.b16 %v807, %v803
        %v992 = vpack.c.b16 %v808, %v804
        %v993 = vpack.c.b16 %v809, %v805
        %v994 = vpack.c.b16 %v810, %v806
        %v995 = vpack.c.b16 %v815, %v811
        %v996 = vpack.c.b16 %v816, %v812
        %v997 = vpack.c.b16 %v817, %v813
        %v998 = vpack.c.b16 %v818, %v814
        %v999 = vpack.c.b16 %v823, %v819
        %v1000 = vpack.c.b16 %v824, %v820
        %v1001 = vpack.c.b16 %v825, %v821
        %v1002 = vpack.c.b16 %v826, %v822
        %v1003 = vpack.c.b16 %v831, %v827
        %v1004 = vpack.c.b16 %v832, %v828
        %v1005 = vpack.c.b16 %v833, %v829
        %v1006 = vpack.c.b16 %v834, %v830
        %v1007 = vpack.c.b16 %v839, %v835
        %v1008 = vpack.c.b16 %v840, %v836
        %v1009 = vpack.c.b16 %v841, %v837
        %v1010 = vpack.c.b16 %v842, %v838
        %v1011 = vpack.c.b16 %v847, %v843
        %v1012 = vpack.c.b16 %v848, %v844
        %v1013 = vpack.c.b16 %v849, %v845
        %v1014 = vpack.c.b16 %v850, %v846
        %v1015 = vpack.c.b16 %v855, %v851
        %v1016 = vpack.c.b16 %v856, %v852
        %v1017 = vpack.c.b16 %v857, %v853
        %v1018 = vpack.c.b16 %v858, %v854
        %v1019 = vpack.c.b16 %v863, %v859
        %v1020 = vpack.c.b16 %v864, %v860
        %v1021 = vpack.c.b16 %v865, %v861
        %v1022 = vpack.c.b16 %v866, %v862
        %v1023 = vpack.c.b16 %v871, %v867
        %v1024 = vpack.c.b16 %v872, %v868
        %v1025 = vpack.c.b16 %v873, %v869
        %v1026 = vpack.c.b16 %v874, %v870
        %v1027 = vpack.c.b16 %v879, %v875
        %v1028 = vpack.c.b16 %v880, %v876
        %v1029 = vpack.c.b16 %v881, %v877
        %v1030 = vpack.c.b16 %v882, %v878
        %v1031 = vpack.c.b16 %v887, %v883
        %v1032 = vpack.c.b16 %v888, %v884
        %v1033 = vpack.c.b16 %v889, %v885
        %v1034 = vpack.c.b16 %v890, %v886
        %v1035 = vpack.c.b16 %v895, %v891
        %v1036 = vpack.c.b16 %v896, %v892
        %v1037 = vpack.c.b16 %v897, %v893
        %v1038 = vpack.c.b16 %v898, %v894
        %v1039 = vpack.c.b16 %v903, %v899
        %v1040 = vpack.c.b16 %v904, %v900
        %v1041 = vpack.c.b16 %v905, %v901
        %v1042 = vpack.c.b16 %v906, %v902
        %v1043 = vpack.c.b16 %v911, %v907
        %v1044 = vpack.c.b16 %v912, %v908
        %v1045 = vpack.c.b16 %v913, %v909
        %v1046 = vpack.c.b16 %v914, %v910
        %v1047 = vpack.c.b16 %v919, %v915
        %v1048 = vpack.c.b16 %v920, %v916
        %v1049 = vpack.c.b16 %v921, %v917
        %v1050 = vpack.c.b16 %v922, %v918
        %1179 = vmatprep.subr.bf16.mxu0 %v952
        %1180 = vmatpush1.bf16.msra.mxu0 %v951
        %1181 = vmatprep.subr.bf16.mxu0 %v948
        %1182 = vmatpush1.bf16.msra.mxu0 %v947
        %1183 = vmatprep.subr.bf16.mxu0 %v944
        %1184 = vmatpush1.bf16.msra.mxu0 %v943
        %1185 = vmatprep.subr.bf16.mxu0 %v940
        %1186 = vmatpush1.bf16.msra.mxu0 %v939
        %1187 = vmatprep.subr.bf16.mxu0 %v936
        %1188 = vmatpush1.bf16.msra.mxu0 %v935
        %1189 = vmatprep.subr.bf16.mxu0 %v932
        %1190 = vmatpush1.bf16.msra.mxu0 %v931
        %1191 = vmatprep.subr.bf16.mxu0 %v928
        %1192 = vmatpush1.bf16.msra.mxu0 %v927
        %1193 = vmatprep.subr.bf16.mxu0 %v924
        %1194 = vmatpush1.bf16.msra.mxu0 %v923
        %1195 = vmatprep.subr.bf16.mxu0 %v984
        %1196 = vmatpush2.bf16.msra.mxu0 %v983
        %1197 = vmatprep.subr.bf16.mxu0 %v980
        %1198 = vmatpush2.bf16.msra.mxu0 %v979
        %1199 = vmatprep.subr.bf16.mxu0 %v976
        %1200 = vmatpush2.bf16.msra.mxu0 %v975
        %1201 = vmatprep.subr.bf16.mxu0 %v972
        %1202 = vmatpush2.bf16.msra.mxu0 %v971
        %1203 = vmatprep.subr.bf16.mxu0 %v968
        %1204 = vmatpush2.bf16.msra.mxu0 %v967
        %1205 = vmatprep.subr.bf16.mxu0 %v964
        %1206 = vmatpush2.bf16.msra.mxu0 %v963
        %1207 = vmatprep.subr.bf16.mxu0 %v960
        %1208 = vmatpush2.bf16.msra.mxu0 %v959
        %1209 = vmatprep.subr.bf16.mxu0 %v956
        %1210 = vmatpush2.bf16.msra.mxu0 %v955
        %1211 = vmatprep.mubr.bf16.mxu0 %v532
        %1212 = vmatmul.mubr.bf16.gmra.mxu0 %v531
        %v1213 = vpop.f32.mrf.mxu0
        %v1214 = vadd.f32 0.0, %v1213
        %v1215 = vpop.f32.mrf.mxu0
        %v1216 = vadd.f32 0.0, %v1215
        %v1217 = vpop.f32.mrf.mxu0
        %v1218 = vadd.f32 0.0, %v1217
        %v1219 = vpop.f32.mrf.mxu0
        %v1220 = vadd.f32 0.0, %v1219
        %1221 = vdwg.mxu0
        %1222 = vmatprep.subr.bf16.mxu0 %v1016
        %1223 = vmatpush1.bf16.msra.mxu0 %v1015
        %1224 = vmatprep.subr.bf16.mxu0 %v1012
        %1225 = vmatpush1.bf16.msra.mxu0 %v1011
        %1226 = vmatprep.subr.bf16.mxu0 %v1008
        %1227 = vmatpush1.bf16.msra.mxu0 %v1007
        %1228 = vmatprep.subr.bf16.mxu0 %v1004
        %1229 = vmatpush1.bf16.msra.mxu0 %v1003
        %1230 = vmatprep.subr.bf16.mxu0 %v1000
        %1231 = vmatpush1.bf16.msra.mxu0 %v999
        %1232 = vmatprep.subr.bf16.mxu0 %v996
        %1233 = vmatpush1.bf16.msra.mxu0 %v995
        %1234 = vmatprep.subr.bf16.mxu0 %v992
        %1235 = vmatpush1.bf16.msra.mxu0 %v991
        %1236 = vmatprep.subr.bf16.mxu0 %v988
        %1237 = vmatpush1.bf16.msra.mxu0 %v987
        %1238 = vmatprep.subr.bf16.mxu0 %v1048
        %1239 = vmatpush2.bf16.msra.mxu0 %v1047
        %1240 = vmatprep.subr.bf16.mxu0 %v1044
        %1241 = vmatpush2.bf16.msra.mxu0 %v1043
        %1242 = vmatprep.subr.bf16.mxu0 %v1040
        %1243 = vmatpush2.bf16.msra.mxu0 %v1039
        %1244 = vmatprep.subr.bf16.mxu0 %v1036
        %1245 = vmatpush2.bf16.msra.mxu0 %v1035
        %1246 = vmatprep.subr.bf16.mxu0 %v1032
        %1247 = vmatpush2.bf16.msra.mxu0 %v1031
        %1248 = vmatprep.subr.bf16.mxu0 %v1028
        %1249 = vmatpush2.bf16.msra.mxu0 %v1027
        %1250 = vmatprep.subr.bf16.mxu0 %v1024
        %1251 = vmatpush2.bf16.msra.mxu0 %v1023
        %1252 = vmatprep.subr.bf16.mxu0 %v1020
        %1253 = vmatpush2.bf16.msra.mxu0 %v1019
        %1254 = vmatprep.mubr.bf16.mxu0 %v534
        %1255 = vmatmul.mubr.bf16.gmra.mxu0 %v533
        %v1256 = vpop.f32.mrf.mxu0
        %v1257 = vadd.f32 %v1214, %v1256
        %v1258 = vpop.f32.mrf.mxu0
        %v1259 = vadd.f32 %v1216, %v1258
        %v1260 = vpop.f32.mrf.mxu0
        %v1261 = vadd.f32 %v1218, %v1260
        %v1262 = vpop.f32.mrf.mxu0
        %v1263 = vadd.f32 %v1220, %v1262
        %1264 = vdwg.mxu0
        %1265 = vmatprep.subr.bf16.mxu0 %v954
        %1266 = vmatpush1.bf16.msra.mxu0 %v953
        %1267 = vmatprep.subr.bf16.mxu0 %v950
        %1268 = vmatpush1.bf16.msra.mxu0 %v949
        %1269 = vmatprep.subr.bf16.mxu0 %v946
        %1270 = vmatpush1.bf16.msra.mxu0 %v945
        %1271 = vmatprep.subr.bf16.mxu0 %v942
        %1272 = vmatpush1.bf16.msra.mxu0 %v941
        %1273 = vmatprep.subr.bf16.mxu0 %v938
        %1274 = vmatpush1.bf16.msra.mxu0 %v937
        %1275 = vmatprep.subr.bf16.mxu0 %v934
        %1276 = vmatpush1.bf16.msra.mxu0 %v933
        %1277 = vmatprep.subr.bf16.mxu0 %v930
        %1278 = vmatpush1.bf16.msra.mxu0 %v929
        %1279 = vmatprep.subr.bf16.mxu0 %v926
        %1280 = vmatpush1.bf16.msra.mxu0 %v925
        %1281 = vmatprep.subr.bf16.mxu0 %v986
        %1282 = vmatpush2.bf16.msra.mxu0 %v985
        %1283 = vmatprep.subr.bf16.mxu0 %v982
        %1284 = vmatpush2.bf16.msra.mxu0 %v981
        %1285 = vmatprep.subr.bf16.mxu0 %v978
        %1286 = vmatpush2.bf16.msra.mxu0 %v977
        %1287 = vmatprep.subr.bf16.mxu0 %v974
        %1288 = vmatpush2.bf16.msra.mxu0 %v973
        %1289 = vmatprep.subr.bf16.mxu0 %v970
        %1290 = vmatpush2.bf16.msra.mxu0 %v969
        %1291 = vmatprep.subr.bf16.mxu0 %v966
        %1292 = vmatpush2.bf16.msra.mxu0 %v965
        %1293 = vmatprep.subr.bf16.mxu0 %v962
        %1294 = vmatpush2.bf16.msra.mxu0 %v961
        %1295 = vmatprep.subr.bf16.mxu0 %v958
        %1296 = vmatpush2.bf16.msra.mxu0 %v957
        %1297 = vmatprep.mubr.bf16.mxu0 %v532
        %1298 = vmatmul.mubr.bf16.gmra.mxu0 %v531
        %v1299 = vpop.f32.mrf.mxu0
        %v1300 = vadd.f32 0.0, %v1299
        %v1301 = vpop.f32.mrf.mxu0
        %v1302 = vadd.f32 0.0, %v1301
        %v1303 = vpop.f32.mrf.mxu0
        %v1304 = vadd.f32 0.0, %v1303
        %v1305 = vpop.f32.mrf.mxu0
        %v1306 = vadd.f32 0.0, %v1305
        %1307 = vdwg.mxu0
        %1308 = vmatprep.subr.bf16.mxu0 %v1018
        %1309 = vmatpush1.bf16.msra.mxu0 %v1017
        %1310 = vmatprep.subr.bf16.mxu0 %v1014
        %1311 = vmatpush1.bf16.msra.mxu0 %v1013
        %1312 = vmatprep.subr.bf16.mxu0 %v1010
        %1313 = vmatpush1.bf16.msra.mxu0 %v1009
        %1314 = vmatprep.subr.bf16.mxu0 %v1006
        %1315 = vmatpush1.bf16.msra.mxu0 %v1005
        %1316 = vmatprep.subr.bf16.mxu0 %v1002
        %1317 = vmatpush1.bf16.msra.mxu0 %v1001
        %1318 = vmatprep.subr.bf16.mxu0 %v998
        %1319 = vmatpush1.bf16.msra.mxu0 %v997
        %1320 = vmatprep.subr.bf16.mxu0 %v994
        %1321 = vmatpush1.bf16.msra.mxu0 %v993
        %1322 = vmatprep.subr.bf16.mxu0 %v990
        %1323 = vmatpush1.bf16.msra.mxu0 %v989
        %1324 = vmatprep.subr.bf16.mxu0 %v1050
        %1325 = vmatpush2.bf16.msra.mxu0 %v1049
        %1326 = vmatprep.subr.bf16.mxu0 %v1046
        %1327 = vmatpush2.bf16.msra.mxu0 %v1045
        %1328 = vmatprep.subr.bf16.mxu0 %v1042
        %1329 = vmatpush2.bf16.msra.mxu0 %v1041
        %1330 = vmatprep.subr.bf16.mxu0 %v1038
        %1331 = vmatpush2.bf16.msra.mxu0 %v1037
        %1332 = vmatprep.subr.bf16.mxu0 %v1034
        %1333 = vmatpush2.bf16.msra.mxu0 %v1033
        %1334 = vmatprep.subr.bf16.mxu0 %v1030
        %1335 = vmatpush2.bf16.msra.mxu0 %v1029
        %1336 = vmatprep.subr.bf16.mxu0 %v1026
        %1337 = vmatpush2.bf16.msra.mxu0 %v1025
        %1338 = vmatprep.subr.bf16.mxu0 %v1022
        %1339 = vmatpush2.bf16.msra.mxu0 %v1021
        %1340 = vmatprep.mubr.bf16.mxu0 %v534
        %1341 = vmatmul.mubr.bf16.gmra.mxu0 %v533
        %v1342 = vpop.f32.mrf.mxu0
        %v1343 = vadd.f32 %v1300, %v1342
        %v1344 = vpop.f32.mrf.mxu0
        %v1345 = vadd.f32 %v1302, %v1344
        %v1346 = vpop.f32.mrf.mxu0
        %v1347 = vadd.f32 %v1304, %v1346
        %v1348 = vpop.f32.mrf.mxu0
        %v1349 = vadd.f32 %v1306, %v1348
        %1350 = vdwg.mxu0
        %v1351 = vadd.f32 %v379, %v1257
        %v1352 = vadd.f32 %v380, %v1259
        %v1353 = vadd.f32 %v381, %v1343
        %v1354 = vadd.f32 %v382, %v1345
        %v1355 = vadd.f32 %v383, %v1261
        %v1356 = vadd.f32 %v384, %v1263
        %v1357 = vadd.f32 %v385, %v1347
        %v1358 = vadd.f32 %v386, %v1349
        %1359 = vst [vmem:[#allocation2] sm:$0xff] %v1351
        %1360 = vst [vmem:[#allocation2 + $0x8] sm:$0xff] %v1352
        %1361 = vst [vmem:[#allocation2 + $0x10] sm:$0xff] %v1353
        %1362 = vst [vmem:[#allocation2 + $0x18] sm:$0xff] %v1354
        %1363 = vst [vmem:[#allocation2 + $0x20] sm:$0xff] %v1355
        %1364 = vst [vmem:[#allocation2 + $0x28] sm:$0xff] %v1356
        %1365 = vst [vmem:[#allocation2 + $0x30] sm:$0xff] %v1357
        %1366 = vst [vmem:[#allocation2 + $0x38] sm:$0xff] %v1358
        %p1367 = scmp.eq.s32.totalorder %s31, 1
        // Predicated region
        $region65: #{tpu_custom_call.1} parent=47 // pred_check
          %p1368 = pneg %p1367
        $region66: #{tpu_custom_call.1} parent=47 // pred_check_branch
          %1370 = sbr.rel (%p1368) target = $region68
        $region67: #{tpu_custom_call.1} parent=47 // pred_region
          %v1371 = vld [vmem:[#allocation2] sm:$0xff]
          %v1372 = vld [vmem:[#allocation2 + $0x8] sm:$0xff]
          %v1373 = vld [vmem:[#allocation2 + $0x10] sm:$0xff]
          %v1374 = vld [vmem:[#allocation2 + $0x18] sm:$0xff]
          %v1375 = vld [vmem:[#allocation2 + $0x20] sm:$0xff]
          %v1376 = vld [vmem:[#allocation2 + $0x28] sm:$0xff]
          %v1377 = vld [vmem:[#allocation2 + $0x30] sm:$0xff]
          %v1378 = vld [vmem:[#allocation2 + $0x38] sm:$0xff]
          %v1379 = vld [vmem:[%s2] sm:$0xf]
          %v1381 = vlaneseq
          %v1382 = vshrl.u32 %v1381, 7
          %v1383 = vsub.s32 0, %v1382
          %v1384 = vrot.slane %v1379, %v1383
          %v1385 = vlaneseq
          %v1386 = vshrl.u32 %v1385, 7
          %v1387 = vsub.s32 1, %v1386
          %v1388 = vrot.slane %v1379, %v1387
          %v1389 = vlaneseq
          %v1390 = vshrl.u32 %v1389, 7
          %v1391 = vsub.s32 2, %v1390
          %v1392 = vrot.slane %v1379, %v1391
          %v1393 = vlaneseq
          %v1394 = vshrl.u32 %v1393, 7
          %v1395 = vsub.s32 3, %v1394
          %v1396 = vrot.slane %v1379, %v1395
          %v1401 = vadd.f32 %v1371, %v1384
          %v1402 = vadd.f32 %v1372, %v1388
          %v1403 = vadd.f32 %v1373, %v1392
          %v1404 = vadd.f32 %v1374, %v1396
          %v1405 = vadd.f32 %v1375, %v1384
          %v1406 = vadd.f32 %v1376, %v1388
          %v1407 = vadd.f32 %v1377, %v1392
          %v1408 = vadd.f32 %v1378, %v1396
          %vm1409 = vcmp.gt.f32.partialorder %v1401, 0.0
          %vm1410 = vcmp.gt.f32.partialorder %v1402, 0.0
          %vm1411 = vcmp.gt.f32.partialorder %v1403, 0.0
          %vm1412 = vcmp.gt.f32.partialorder %v1404, 0.0
          %vm1413 = vcmp.gt.f32.partialorder %v1405, 0.0
          %vm1414 = vcmp.gt.f32.partialorder %v1406, 0.0
          %vm1415 = vcmp.gt.f32.partialorder %v1407, 0.0
          %vm1416 = vcmp.gt.f32.partialorder %v1408, 0.0
          %v1417 = vmul.f32 %v1401, 0.2
          %v1418 = vmul.f32 %v1402, 0.2
          %v1419 = vmul.f32 %v1403, 0.2
          %v1420 = vmul.f32 %v1404, 0.2
          %v1421 = vmul.f32 %v1405, 0.2
          %v1422 = vmul.f32 %v1406, 0.2
          %v1423 = vmul.f32 %v1407, 0.2
          %v1424 = vmul.f32 %v1408, 0.2
          %v1425 = vsel %vm1409, %v1401, %v1417
          %v1426 = vsel %vm1410, %v1402, %v1418
          %v1427 = vsel %vm1411, %v1403, %v1419
          %v1428 = vsel %vm1412, %v1404, %v1420
          %v1429 = vsel %vm1413, %v1405, %v1421
          %v1430 = vsel %vm1414, %v1406, %v1422
          %v1431 = vsel %vm1415, %v1407, %v1423
          %v1432 = vsel %vm1416, %v1408, %v1424
          %v1433 = vpack.c.bf16 %v1429, %v1425
          %v1434 = vpack.c.bf16 %v1430, %v1426
          %v1435 = vpack.c.bf16 %v1431, %v1427
          %v1436 = vpack.c.bf16 %v1432, %v1428
          %v1437 = vld [vmem:[#allocation9] sm:$0xff]
          %v1438 = vld [vmem:[#allocation9 + $0x8] sm:$0xff]
          %v1439 = vld [vmem:[#allocation9 + $0x10] sm:$0xff]
          %v1440 = vld [vmem:[#allocation9 + $0x18] sm:$0xff]
          %v1441 = vld [vmem:[#allocation9 + $0x20] sm:$0xff]
          %v1442 = vld [vmem:[#allocation9 + $0x28] sm:$0xff]
          %v1443 = vld [vmem:[#allocation9 + $0x30] sm:$0xff]
          %v1444 = vld [vmem:[#allocation9 + $0x38] sm:$0xff]
          %v1445 = vld [vmem:[#allocation9 + $0x40] sm:$0xff]
          %v1446 = vld [vmem:[#allocation9 + $0x48] sm:$0xff]
          %v1447 = vld [vmem:[#allocation9 + $0x50] sm:$0xff]
          %v1448 = vld [vmem:[#allocation9 + $0x58] sm:$0xff]
          %v1449 = vld [vmem:[#allocation9 + $0x60] sm:$0xff]
          %v1450 = vld [vmem:[#allocation9 + $0x68] sm:$0xff]
          %v1451 = vld [vmem:[#allocation9 + $0x70] sm:$0xff]
          %v1452 = vld [vmem:[#allocation9 + $0x78] sm:$0xff]
          %v1453 = vld [vmem:[#allocation9 + $0x80] sm:$0xff]
          %v1454 = vld [vmem:[#allocation9 + $0x88] sm:$0xff]
          %v1455 = vld [vmem:[#allocation9 + $0x90] sm:$0xff]
          %v1456 = vld [vmem:[#allocation9 + $0x98] sm:$0xff]
          %v1457 = vld [vmem:[#allocation9 + $0xa0] sm:$0xff]
          %v1458 = vld [vmem:[#allocation9 + $0xa8] sm:$0xff]
          %v1459 = vld [vmem:[#allocation9 + $0xb0] sm:$0xff]
          %v1460 = vld [vmem:[#allocation9 + $0xb8] sm:$0xff]
          %v1461 = vld [vmem:[#allocation9 + $0xc0] sm:$0xff]
          %v1462 = vld [vmem:[#allocation9 + $0xc8] sm:$0xff]
          %v1463 = vld [vmem:[#allocation9 + $0xd0] sm:$0xff]
          %v1464 = vld [vmem:[#allocation9 + $0xd8] sm:$0xff]
          %v1465 = vld [vmem:[#allocation9 + $0xe0] sm:$0xff]
          %v1466 = vld [vmem:[#allocation9 + $0xe8] sm:$0xff]
          %v1467 = vld [vmem:[#allocation9 + $0xf0] sm:$0xff]
          %v1468 = vld [vmem:[#allocation9 + $0xf8] sm:$0xff]
          %v1469 = vld [vmem:[#allocation9 + $0x100] sm:$0xff]
          %v1470 = vld [vmem:[#allocation9 + $0x108] sm:$0xff]
          %v1471 = vld [vmem:[#allocation9 + $0x110] sm:$0xff]
          %v1472 = vld [vmem:[#allocation9 + $0x118] sm:$0xff]
          %v1473 = vld [vmem:[#allocation9 + $0x120] sm:$0xff]
          %v1474 = vld [vmem:[#allocation9 + $0x128] sm:$0xff]
          %v1475 = vld [vmem:[#allocation9 + $0x130] sm:$0xff]
          %v1476 = vld [vmem:[#allocation9 + $0x138] sm:$0xff]
          %v1477 = vld [vmem:[#allocation9 + $0x140] sm:$0xff]
          %v1478 = vld [vmem:[#allocation9 + $0x148] sm:$0xff]
          %v1479 = vld [vmem:[#allocation9 + $0x150] sm:$0xff]
          %v1480 = vld [vmem:[#allocation9 + $0x158] sm:$0xff]
          %v1481 = vld [vmem:[#allocation9 + $0x160] sm:$0xff]
          %v1482 = vld [vmem:[#allocation9 + $0x168] sm:$0xff]
          %v1483 = vld [vmem:[#allocation9 + $0x170] sm:$0xff]
          %v1484 = vld [vmem:[#allocation9 + $0x178] sm:$0xff]
          %v1485 = vld [vmem:[#allocation9 + $0x180] sm:$0xff]
          %v1486 = vld [vmem:[#allocation9 + $0x188] sm:$0xff]
          %v1487 = vld [vmem:[#allocation9 + $0x190] sm:$0xff]
          %v1488 = vld [vmem:[#allocation9 + $0x198] sm:$0xff]
          %v1489 = vld [vmem:[#allocation9 + $0x1a0] sm:$0xff]
          %v1490 = vld [vmem:[#allocation9 + $0x1a8] sm:$0xff]
          %v1491 = vld [vmem:[#allocation9 + $0x1b0] sm:$0xff]
          %v1492 = vld [vmem:[#allocation9 + $0x1b8] sm:$0xff]
          %v1493 = vld [vmem:[#allocation9 + $0x1c0] sm:$0xff]
          %v1494 = vld [vmem:[#allocation9 + $0x1c8] sm:$0xff]
          %v1495 = vld [vmem:[#allocation9 + $0x1d0] sm:$0xff]
          %v1496 = vld [vmem:[#allocation9 + $0x1d8] sm:$0xff]
          %v1497 = vld [vmem:[#allocation9 + $0x1e0] sm:$0xff]
          %v1498 = vld [vmem:[#allocation9 + $0x1e8] sm:$0xff]
          %v1499 = vld [vmem:[#allocation9 + $0x1f0] sm:$0xff]
          %v1500 = vld [vmem:[#allocation9 + $0x1f8] sm:$0xff]
          %v1501 = vld [vmem:[%s4] sm:$0x3]
          %v1503 = vlaneseq
          %v1504 = vshrl.u32 %v1503, 7
          %v1505 = vsub.s32 0, %v1504
          %v1506 = vrot.slane %v1501, %v1505
          %v1507 = vlaneseq
          %v1508 = vshrl.u32 %v1507, 7
          %v1509 = vsub.s32 1, %v1508
          %v1510 = vrot.slane %v1501, %v1509
          %v1577 = vunpack.c.l.b16 %v1437
          %v1578 = vunpack.c.h.b16 %v1437
          %v1579 = vunpack.c.l.b16 %v1438
          %v1580 = vunpack.c.h.b16 %v1438
          %v1581 = vunpack.c.l.b16 %v1439
          %v1582 = vunpack.c.h.b16 %v1439
          %v1583 = vunpack.c.l.b16 %v1440
          %v1584 = vunpack.c.h.b16 %v1440
          %v1585 = vunpack.c.l.b16 %v1441
          %v1586 = vunpack.c.h.b16 %v1441
          %v1587 = vunpack.c.l.b16 %v1442
          %v1588 = vunpack.c.h.b16 %v1442
          %v1589 = vunpack.c.l.b16 %v1443
          %v1590 = vunpack.c.h.b16 %v1443
          %v1591 = vunpack.c.l.b16 %v1444
          %v1592 = vunpack.c.h.b16 %v1444
          %v1593 = vunpack.c.l.b16 %v1445
          %v1594 = vunpack.c.h.b16 %v1445
          %v1595 = vunpack.c.l.b16 %v1446
          %v1596 = vunpack.c.h.b16 %v1446
          %v1597 = vunpack.c.l.b16 %v1447
          %v1598 = vunpack.c.h.b16 %v1447
          %v1599 = vunpack.c.l.b16 %v1448
          %v1600 = vunpack.c.h.b16 %v1448
          %v1601 = vunpack.c.l.b16 %v1449
          %v1602 = vunpack.c.h.b16 %v1449
          %v1603 = vunpack.c.l.b16 %v1450
          %v1604 = vunpack.c.h.b16 %v1450
          %v1605 = vunpack.c.l.b16 %v1451
          %v1606 = vunpack.c.h.b16 %v1451
          %v1607 = vunpack.c.l.b16 %v1452
          %v1608 = vunpack.c.h.b16 %v1452
          %v1609 = vunpack.c.l.b16 %v1453
          %v1610 = vunpack.c.h.b16 %v1453
          %v1611 = vunpack.c.l.b16 %v1454
          %v1612 = vunpack.c.h.b16 %v1454
          %v1613 = vunpack.c.l.b16 %v1455
          %v1614 = vunpack.c.h.b16 %v1455
          %v1615 = vunpack.c.l.b16 %v1456
          %v1616 = vunpack.c.h.b16 %v1456
          %v1617 = vunpack.c.l.b16 %v1457
          %v1618 = vunpack.c.h.b16 %v1457
          %v1619 = vunpack.c.l.b16 %v1458
          %v1620 = vunpack.c.h.b16 %v1458
          %v1621 = vunpack.c.l.b16 %v1459
          %v1622 = vunpack.c.h.b16 %v1459
          %v1623 = vunpack.c.l.b16 %v1460
          %v1624 = vunpack.c.h.b16 %v1460
          %v1625 = vunpack.c.l.b16 %v1461
          %v1626 = vunpack.c.h.b16 %v1461
          %v1627 = vunpack.c.l.b16 %v1462
          %v1628 = vunpack.c.h.b16 %v1462
          %v1629 = vunpack.c.l.b16 %v1463
          %v1630 = vunpack.c.h.b16 %v1463
          %v1631 = vunpack.c.l.b16 %v1464
          %v1632 = vunpack.c.h.b16 %v1464
          %v1633 = vunpack.c.l.b16 %v1465
          %v1634 = vunpack.c.h.b16 %v1465
          %v1635 = vunpack.c.l.b16 %v1466
          %v1636 = vunpack.c.h.b16 %v1466
          %v1637 = vunpack.c.l.b16 %v1467
          %v1638 = vunpack.c.h.b16 %v1467
          %v1639 = vunpack.c.l.b16 %v1468
          %v1640 = vunpack.c.h.b16 %v1468
          %v1641 = vunpack.c.l.b16 %v1469
          %v1642 = vunpack.c.h.b16 %v1469
          %v1643 = vunpack.c.l.b16 %v1470
          %v1644 = vunpack.c.h.b16 %v1470
          %v1645 = vunpack.c.l.b16 %v1471
          %v1646 = vunpack.c.h.b16 %v1471
          %v1647 = vunpack.c.l.b16 %v1472
          %v1648 = vunpack.c.h.b16 %v1472
          %v1649 = vunpack.c.l.b16 %v1473
          %v1650 = vunpack.c.h.b16 %v1473
          %v1651 = vunpack.c.l.b16 %v1474
          %v1652 = vunpack.c.h.b16 %v1474
          %v1653 = vunpack.c.l.b16 %v1475
          %v1654 = vunpack.c.h.b16 %v1475
          %v1655 = vunpack.c.l.b16 %v1476
          %v1656 = vunpack.c.h.b16 %v1476
          %v1657 = vunpack.c.l.b16 %v1477
          %v1658 = vunpack.c.h.b16 %v1477
          %v1659 = vunpack.c.l.b16 %v1478
          %v1660 = vunpack.c.h.b16 %v1478
          %v1661 = vunpack.c.l.b16 %v1479
          %v1662 = vunpack.c.h.b16 %v1479
          %v1663 = vunpack.c.l.b16 %v1480
          %v1664 = vunpack.c.h.b16 %v1480
          %v1665 = vunpack.c.l.b16 %v1481
          %v1666 = vunpack.c.h.b16 %v1481
          %v1667 = vunpack.c.l.b16 %v1482
          %v1668 = vunpack.c.h.b16 %v1482
          %v1669 = vunpack.c.l.b16 %v1483
          %v1670 = vunpack.c.h.b16 %v1483
          %v1671 = vunpack.c.l.b16 %v1484
          %v1672 = vunpack.c.h.b16 %v1484
          %v1673 = vunpack.c.l.b16 %v1485
          %v1674 = vunpack.c.h.b16 %v1485
          %v1675 = vunpack.c.l.b16 %v1486
          %v1676 = vunpack.c.h.b16 %v1486
          %v1677 = vunpack.c.l.b16 %v1487
          %v1678 = vunpack.c.h.b16 %v1487
          %v1679 = vunpack.c.l.b16 %v1488
          %v1680 = vunpack.c.h.b16 %v1488
          %v1681 = vunpack.c.l.b16 %v1489
          %v1682 = vunpack.c.h.b16 %v1489
          %v1683 = vunpack.c.l.b16 %v1490
          %v1684 = vunpack.c.h.b16 %v1490
          %v1685 = vunpack.c.l.b16 %v1491
          %v1686 = vunpack.c.h.b16 %v1491
          %v1687 = vunpack.c.l.b16 %v1492
          %v1688 = vunpack.c.h.b16 %v1492
          %v1689 = vunpack.c.l.b16 %v1493
          %v1690 = vunpack.c.h.b16 %v1493
          %v1691 = vunpack.c.l.b16 %v1494
          %v1692 = vunpack.c.h.b16 %v1494
          %v1693 = vunpack.c.l.b16 %v1495
          %v1694 = vunpack.c.h.b16 %v1495
          %v1695 = vunpack.c.l.b16 %v1496
          %v1696 = vunpack.c.h.b16 %v1496
          %v1697 = vunpack.c.l.b16 %v1497
          %v1698 = vunpack.c.h.b16 %v1497
          %v1699 = vunpack.c.l.b16 %v1498
          %v1700 = vunpack.c.h.b16 %v1498
          %v1701 = vunpack.c.l.b16 %v1499
          %v1702 = vunpack.c.h.b16 %v1499
          %v1703 = vunpack.c.l.b16 %v1500
          %v1704 = vunpack.c.h.b16 %v1500
          %v1705 = vpack.c.b16 %v1579, %v1577
          %v1706 = vpack.c.b16 %v1580, %v1578
          %v1707 = vpack.c.b16 %v1583, %v1581
          %v1708 = vpack.c.b16 %v1584, %v1582
          %v1709 = vpack.c.b16 %v1587, %v1585
          %v1710 = vpack.c.b16 %v1588, %v1586
          %v1711 = vpack.c.b16 %v1591, %v1589
          %v1712 = vpack.c.b16 %v1592, %v1590
          %v1713 = vpack.c.b16 %v1595, %v1593
          %v1714 = vpack.c.b16 %v1596, %v1594
          %v1715 = vpack.c.b16 %v1599, %v1597
          %v1716 = vpack.c.b16 %v1600, %v1598
          %v1717 = vpack.c.b16 %v1603, %v1601
          %v1718 = vpack.c.b16 %v1604, %v1602
          %v1719 = vpack.c.b16 %v1607, %v1605
          %v1720 = vpack.c.b16 %v1608, %v1606
          %v1721 = vpack.c.b16 %v1611, %v1609
          %v1722 = vpack.c.b16 %v1612, %v1610
          %v1723 = vpack.c.b16 %v1615, %v1613
          %v1724 = vpack.c.b16 %v1616, %v1614
          %v1725 = vpack.c.b16 %v1619, %v1617
          %v1726 = vpack.c.b16 %v1620, %v1618
          %v1727 = vpack.c.b16 %v1623, %v1621
          %v1728 = vpack.c.b16 %v1624, %v1622
          %v1729 = vpack.c.b16 %v1627, %v1625
          %v1730 = vpack.c.b16 %v1628, %v1626
          %v1731 = vpack.c.b16 %v1631, %v1629
          %v1732 = vpack.c.b16 %v1632, %v1630
          %v1733 = vpack.c.b16 %v1635, %v1633
          %v1734 = vpack.c.b16 %v1636, %v1634
          %v1735 = vpack.c.b16 %v1639, %v1637
          %v1736 = vpack.c.b16 %v1640, %v1638
          %v1737 = vpack.c.b16 %v1643, %v1641
          %v1738 = vpack.c.b16 %v1644, %v1642
          %v1739 = vpack.c.b16 %v1647, %v1645
          %v1740 = vpack.c.b16 %v1648, %v1646
          %v1741 = vpack.c.b16 %v1651, %v1649
          %v1742 = vpack.c.b16 %v1652, %v1650
          %v1743 = vpack.c.b16 %v1655, %v1653
          %v1744 = vpack.c.b16 %v1656, %v1654
          %v1745 = vpack.c.b16 %v1659, %v1657
          %v1746 = vpack.c.b16 %v1660, %v1658
          %v1747 = vpack.c.b16 %v1663, %v1661
          %v1748 = vpack.c.b16 %v1664, %v1662
          %v1749 = vpack.c.b16 %v1667, %v1665
          %v1750 = vpack.c.b16 %v1668, %v1666
          %v1751 = vpack.c.b16 %v1671, %v1669
          %v1752 = vpack.c.b16 %v1672, %v1670
          %v1753 = vpack.c.b16 %v1675, %v1673
          %v1754 = vpack.c.b16 %v1676, %v1674
          %v1755 = vpack.c.b16 %v1679, %v1677
          %v1756 = vpack.c.b16 %v1680, %v1678
          %v1757 = vpack.c.b16 %v1683, %v1681
          %v1758 = vpack.c.b16 %v1684, %v1682
          %v1759 = vpack.c.b16 %v1687, %v1685
          %v1760 = vpack.c.b16 %v1688, %v1686
          %v1761 = vpack.c.b16 %v1691, %v1689
          %v1762 = vpack.c.b16 %v1692, %v1690
          %v1763 = vpack.c.b16 %v1695, %v1693
          %v1764 = vpack.c.b16 %v1696, %v1694
          %v1765 = vpack.c.b16 %v1699, %v1697
          %v1766 = vpack.c.b16 %v1700, %v1698
          %v1767 = vpack.c.b16 %v1703, %v1701
          %v1768 = vpack.c.b16 %v1704, %v1702
          %1833 = vmatprep.subr.bf16.mxu0 %v1720
          %1834 = vmatpush1.bf16.msra.mxu0 %v1719
          %1835 = vmatprep.subr.bf16.mxu0 %v1718
          %1836 = vmatpush1.bf16.msra.mxu0 %v1717
          %1837 = vmatprep.subr.bf16.mxu0 %v1716
          %1838 = vmatpush1.bf16.msra.mxu0 %v1715
          %1839 = vmatprep.subr.bf16.mxu0 %v1714
          %1840 = vmatpush1.bf16.msra.mxu0 %v1713
          %1841 = vmatprep.subr.bf16.mxu0 %v1712
          %1842 = vmatpush1.bf16.msra.mxu0 %v1711
          %1843 = vmatprep.subr.bf16.mxu0 %v1710
          %1844 = vmatpush1.bf16.msra.mxu0 %v1709
          %1845 = vmatprep.subr.bf16.mxu0 %v1708
          %1846 = vmatpush1.bf16.msra.mxu0 %v1707
          %1847 = vmatprep.subr.bf16.mxu0 %v1706
          %1848 = vmatpush1.bf16.msra.mxu0 %v1705
          %1849 = vmatprep.subr.bf16.mxu0 %v1736
          %1850 = vmatpush2.bf16.msra.mxu0 %v1735
          %1851 = vmatprep.subr.bf16.mxu0 %v1734
          %1852 = vmatpush2.bf16.msra.mxu0 %v1733
          %1853 = vmatprep.subr.bf16.mxu0 %v1732
          %1854 = vmatpush2.bf16.msra.mxu0 %v1731
          %1855 = vmatprep.subr.bf16.mxu0 %v1730
          %1856 = vmatpush2.bf16.msra.mxu0 %v1729
          %1857 = vmatprep.subr.bf16.mxu0 %v1728
          %1858 = vmatpush2.bf16.msra.mxu0 %v1727
          %1859 = vmatprep.subr.bf16.mxu0 %v1726
          %1860 = vmatpush2.bf16.msra.mxu0 %v1725
          %1861 = vmatprep.subr.bf16.mxu0 %v1724
          %1862 = vmatpush2.bf16.msra.mxu0 %v1723
          %1863 = vmatprep.subr.bf16.mxu0 %v1722
          %1864 = vmatpush2.bf16.msra.mxu0 %v1721
          %1865 = vmatprep.mubr.bf16.mxu0 %v1434
          %1866 = vmatmul.mubr.bf16.gmra.mxu0 %v1433
          %v1867 = vpop.f32.mrf.mxu0
          %v1868 = vadd.f32 %v1506, %v1867
          %v1869 = vpop.f32.mrf.mxu0
          %v1870 = vadd.f32 %v1510, %v1869
          %v1871 = vpop.f32.mrf.mxu0
          %v1872 = vadd.f32 %v1506, %v1871
          %v1873 = vpop.f32.mrf.mxu0
          %v1874 = vadd.f32 %v1510, %v1873
          %1875 = vdwg.mxu0
          %1876 = vmatprep.subr.bf16.mxu0 %v1752
          %1877 = vmatpush1.bf16.msra.mxu0 %v1751
          %1878 = vmatprep.subr.bf16.mxu0 %v1750
          %1879 = vmatpush1.bf16.msra.mxu0 %v1749
          %1880 = vmatprep.subr.bf16.mxu0 %v1748
          %1881 = vmatpush1.bf16.msra.mxu0 %v1747
          %1882 = vmatprep.subr.bf16.mxu0 %v1746
          %1883 = vmatpush1.bf16.msra.mxu0 %v1745
          %1884 = vmatprep.subr.bf16.mxu0 %v1744
          %1885 = vmatpush1.bf16.msra.mxu0 %v1743
          %1886 = vmatprep.subr.bf16.mxu0 %v1742
          %1887 = vmatpush1.bf16.msra.mxu0 %v1741
          %1888 = vmatprep.subr.bf16.mxu0 %v1740
          %1889 = vmatpush1.bf16.msra.mxu0 %v1739
          %1890 = vmatprep.subr.bf16.mxu0 %v1738
          %1891 = vmatpush1.bf16.msra.mxu0 %v1737
          %1892 = vmatprep.subr.bf16.mxu0 %v1768
          %1893 = vmatpush2.bf16.msra.mxu0 %v1767
          %1894 = vmatprep.subr.bf16.mxu0 %v1766
          %1895 = vmatpush2.bf16.msra.mxu0 %v1765
          %1896 = vmatprep.subr.bf16.mxu0 %v1764
          %1897 = vmatpush2.bf16.msra.mxu0 %v1763
          %1898 = vmatprep.subr.bf16.mxu0 %v1762
          %1899 = vmatpush2.bf16.msra.mxu0 %v1761
          %1900 = vmatprep.subr.bf16.mxu0 %v1760
          %1901 = vmatpush2.bf16.msra.mxu0 %v1759
          %1902 = vmatprep.subr.bf16.mxu0 %v1758
          %1903 = vmatpush2.bf16.msra.mxu0 %v1757
          %1904 = vmatprep.subr.bf16.mxu0 %v1756
          %1905 = vmatpush2.bf16.msra.mxu0 %v1755
          %1906 = vmatprep.subr.bf16.mxu0 %v1754
          %1907 = vmatpush2.bf16.msra.mxu0 %v1753
          %1908 = vmatprep.mubr.bf16.mxu0 %v1436
          %1909 = vmatmul.mubr.bf16.gmra.mxu0 %v1435
          %v1910 = vpop.f32.mrf.mxu0
          %v1911 = vadd.f32 %v1868, %v1910
          %v1912 = vpop.f32.mrf.mxu0
          %v1913 = vadd.f32 %v1870, %v1912
          %v1914 = vpop.f32.mrf.mxu0
          %v1915 = vadd.f32 %v1872, %v1914
          %v1916 = vpop.f32.mrf.mxu0
          %v1917 = vadd.f32 %v1874, %v1916
          %1918 = vdwg.mxu0
          %vm1919 = vcmp.gt.f32.partialorder %v1911, 0.0
          %vm1920 = vcmp.gt.f32.partialorder %v1913, 0.0
          %vm1921 = vcmp.gt.f32.partialorder %v1915, 0.0
          %vm1922 = vcmp.gt.f32.partialorder %v1917, 0.0
          %v1923 = vmul.f32 %v1911, 0.2
          %v1924 = vmul.f32 %v1913, 0.2
          %v1925 = vmul.f32 %v1915, 0.2
          %v1926 = vmul.f32 %v1917, 0.2
          %v1927 = vsel %vm1919, %v1911, %v1923
          %v1928 = vsel %vm1920, %v1913, %v1924
          %v1929 = vsel %vm1921, %v1915, %v1925
          %v1930 = vsel %vm1922, %v1917, %v1926
          %v1931 = vld [vmem:[%s5] sm:$0x3]
          %v1933 = vlaneseq
          %v1934 = vshrl.u32 %v1933, 7
          %v1935 = vsub.s32 0, %v1934
          %v1936 = vrot.slane %v1931, %v1935
          %v1937 = vlaneseq
          %v1938 = vshrl.u32 %v1937, 7
          %v1939 = vsub.s32 1, %v1938
          %v1940 = vrot.slane %v1931, %v1939
          %v1943 = vpack.c.bf16 %v1936, %v1936
          %v1944 = vpack.c.bf16 %v1940, %v1940
          %v1945 = vpack.c.bf16 %v1929, %v1927
          %v1946 = vpack.c.bf16 %v1930, %v1928
          %s1947 = sld [smem:[#allocation3]]
          %v1948 = vstv %s1947
          %1949 = vmatprep.subr.bf16.mxu0 0
          %1950 = vmatpush1.bf16.xpose.msra.mxu0 0
          %1951 = vmatprep.subr.bf16.mxu0 0
          %1952 = vmatpush1.bf16.xpose.msra.mxu0 0
          %1953 = vmatprep.subr.bf16.mxu0 0
          %1954 = vmatpush1.bf16.xpose.msra.mxu0 0
          %1955 = vmatprep.subr.bf16.mxu0 0
          %1956 = vmatpush1.bf16.xpose.msra.mxu0 0
          %1957 = vmatprep.subr.bf16.mxu0 0
          %1958 = vmatpush1.bf16.xpose.msra.mxu0 0
          %1959 = vmatprep.subr.bf16.mxu0 0
          %1960 = vmatpush1.bf16.xpose.msra.mxu0 0
          %1961 = vmatprep.subr.bf16.mxu0 0
          %1962 = vmatpush1.bf16.xpose.msra.mxu0 0
          %1963 = vmatprep.subr.bf16.mxu0 %v1946
          %1964 = vmatpush1.bf16.xpose.msra.mxu0 %v1945
          %1965 = vmatprep.subr.bf16.mxu0 0
          %1966 = vmatpush2.bf16.xpose.msra.mxu0 0
          %1967 = vmatprep.subr.bf16.mxu0 0
          %1968 = vmatpush2.bf16.xpose.msra.mxu0 0
          %1969 = vmatprep.subr.bf16.mxu0 0
          %1970 = vmatpush2.bf16.xpose.msra.mxu0 0
          %1971 = vmatprep.subr.bf16.mxu0 0
          %1972 = vmatpush2.bf16.xpose.msra.mxu0 0
          %1973 = vmatprep.subr.bf16.mxu0 0
          %1974 = vmatpush2.bf16.xpose.msra.mxu0 0
          %1975 = vmatprep.subr.bf16.mxu0 0
          %1976 = vmatpush2.bf16.xpose.msra.mxu0 0
          %1977 = vmatprep.subr.bf16.mxu0 0
          %1978 = vmatpush2.bf16.xpose.msra.mxu0 0
          %1979 = vmatprep.subr.bf16.mxu0 0
          %1980 = vmatpush2.bf16.xpose.msra.mxu0 0
          %1981 = vmatprep.mubr.bf16.mxu0 %v1944
          %1982 = vmatmul.mubr.bf16.gmra.mxu0 %v1943
          %v1983 = vpop.f32.mrf.mxu0
          %v1984 = vadd.f32 %v1948, %v1983
          %v1985 = vpop.f32.mrf.mxu0
          %v1986 = vpop.f32.mrf.mxu0
          %v1987 = vpop.f32.mrf.mxu0
          %1988 = vdwg.mxu0
          %v1989 = vsub.f32 0.0, %v1984
          %v1990 = vmul.f32 %v1989, 1.442695
          %v1991 = vpow.pop %v1990
          %v1992 = vadd.f32 %v1991, 1.0
          %v1993 = vrcp.pop %v1992
          %vm1994 = vcmask 122880
          %1995 = vst.msk [vmem:[#allocation10] sm:$0x1] %vm1994, %v1993
        $region68: #{tpu_custom_call.1} parent=47 // pred_fallthru
          _
        // Predicated region
        $region69: #{tpu_custom_call.1} parent=47 // pred_check
          %p1996 = pneg %p215
        $region70: #{tpu_custom_call.1} parent=47 // pred_check_branch
          %1998 = sbr.rel (%p1996) target = $region72
        $region71: #{tpu_custom_call.1} parent=47 // pred_region
          %s2000 = ssub.s32 16, 16
          %2001 = vsyncadd [#allocation6], %s2000
          %s2002 = smul.addr %s30, 16
          %s2003 = scalar_lea.hbm %s7, %s2002
          %s2005 = sshll.u32 [#allocation10], 4
          %s2006 = int_to_ptr.vmem [resolvable:$true] %s2005
          %2008 = dma.vmem_to_hbm [thread:$0]  %s2006, 16, %s2003, [#allocation6]
        $region72: #{tpu_custom_call.1} parent=47 // pred_fallthru
          _
        // Predicated region
        $region73: #{tpu_custom_call.1} parent=47 // pred_check
          %p2009 = pneg %p215
        $region74: #{tpu_custom_call.1} parent=47 // pred_check_branch
          %2011 = sbr.rel (%p2009) target = $region76
        $region75: #{tpu_custom_call.1} parent=47 // pred_region
          %2012 = dma.done [#allocation6], 16
        $region76: #{tpu_custom_call.1} parent=47 // pred_fallthru
          _
      $region48: #{tpu_custom_call.1} parent=5 // pred_fallthru
        _
      %p2013 = scmp.le.s32.totalorder 2, %s21
      // Predicated region
      $region77: #{tpu_custom_call.1} parent=5 // pred_check
        %p2014 = pneg %p2013
      $region78: #{tpu_custom_call.1} parent=5 // pred_check_branch
        %2016 = sbr.rel (%p2014) target = $region80
      $region79: #{tpu_custom_call.1} parent=5 // pred_region
        %s2017 = ssub.s32 %s21, 2
      $region80: #{tpu_custom_call.1} parent=5 // pred_fallthru
        _
    $region6: #{tpu_custom_call.1} parent=1 // loop_footer
      %s25 = sadd.s32 1, %s21
    $region7: #{tpu_custom_call.1} parent=1 // loop_footer_branch
      %20 = sbr.rel target = $region3
    $region8: #{tpu_custom_call.1} parent=1 // loop_exit
      _
    %2018 = vsyncpa [#allocation5], 1
    %s2019 = scalar_lea.sflag [#allocation5], 1
    %2020 = vsyncpa %s2019, 1
    %2021 = vsyncpa [#allocation8], 1
    %s2022 = scalar_lea.sflag [#allocation8], 1
    %2023 = vsyncpa %s2022, 1
    %2024 = vsyncpa [#allocation6], 1
    %s2025 = scalar_lea.sflag [#allocation6], 1
    %2026 = vsyncpa %s2025, 1

</llo_original>
